<compile_context>
chip_gen: v7x
topology: tpu7x:2x2x1
jax: 0.10.0
libtpu: 0.0.40
codegen_flags: <defaults>
</compile_context>

<pallas_src>
import functools

import jax
import jax.numpy as jnp
from jax.experimental import pallas as pl
from jax.experimental.pallas import tpu as pltpu


# ------------------------------- helpers ------------------------------------

def _round_up(a, b):
    return ((a + b - 1) // b) * b


def _largest_divisor_leq(n, cap):
    """Largest divisor of n that is <= cap (always >= 1)."""
    best = 1
    for d in range(1, n + 1):
        if n % d == 0 and d <= cap:
            best = d
    return best


def _largest_multiple_divisor_leq(total, unit, cap):
    """Largest divisor of `total` that is a multiple of `unit` and <= cap."""
    best = unit
    d = unit
    while d <= min(total, cap):
        if total % d == 0:
            best = d
        d += unit
    return best


# ----------------------------- Pallas kernels -------------------------------

def _cconv_stats_kernel(x_ref, w_ref, y_ref, sum_ref, sq_ref,
                        *, kh, trh, owa, ow, cp):
    """Complex conv as `kh` width-folded MXU matmuls + fused BN partials.

    x_ref:   (1, Hp, OWa, kw*2*Cin) bf16  width-im2col'd, zero-padded image
    w_ref:   (kh, kw*2*Cin, Cp)     bf16  combined complex weights per row tap
    y_ref:   (trh*OWa, Cp)          bf16  conv output rows for this tile
    sum_ref: (1, 1, Cp)             f32   per-tile column sum
    sq_ref:  (1, 1, Cp)             f32   per-tile column sum of squares
    """
    j = pl.program_id(1)                      # row-tile index within the image
    row0 = pl.multiple_of(j * trh, trh)

    # f32 accumulator bounded to trh*OWa (<=128) rows.
    acc = jnp.zeros((trh * owa, cp), jnp.float32)
    for u in range(kh):                       # kh matmuls, K = kw*2*Cin
        xs = x_ref[0, pl.ds(row0 + u, trh), :, :]      # (trh, OWa, kw*2*Cin)
        xs = xs.reshape(trh * owa, xs.shape[-1])       # leading-dim collapse
        acc = acc + jnp.dot(xs, w_ref[u],
                            preferred_element_type=jnp.float32)

    # Store the conv output tile in bf16 (stats below still use the f32 acc).
    y_ref[...] = acc.astype(y_ref.dtype)

    # Mask out lane-padding output columns from the statistics (static check;
    # compiled only when OWa > ow).  Those rows are discarded at extraction.
    if ow != owa:
        col = jax.lax.broadcasted_iota(jnp.int32, (trh, owa), 1)
        col = col.reshape(trh * owa, 1)
        acc = jnp.where(col < ow, acc, 0.0)

    sum_ref[...] = jnp.sum(acc, axis=0, keepdims=True).reshape(1, 1, cp)
    sq_ref[...] = jnp.sum(acc * acc, axis=0, keepdims=True).reshape(1, 1, cp)


def _bn_relu_kernel(y_ref, scale_ref, shift_ref, o_ref):
    # y_ref: (tr2, Cp) bf16;  scale/shift: (1, Cp) f32;  o_ref: (tr2, Cp) f32
    y = y_ref[...].astype(jnp.float32)        # f32 VPU math (v5e-safe)
    o_ref[...] = jnp.maximum(y * scale_ref[...] + shift_ref[...], 0.0)


# ------------------------------ host wrapper ---------------------------------

@functools.partial(jax.jit, static_argnames=("kh", "kw", "pad", "eps"))
def complex_conv_block(x, w_real, w_imag, b_real, b_imag,
                       gamma_r, beta_r, gamma_i, beta_i,
                       *, kh=3, kw=3, pad=1, eps=1e-5):
    """x: [N, Cin, H, W, 2] -> [N, Cout, Hout, Wout, 2] (stride-1 conv)."""
    n, cin, h, w, _ = x.shape
    cout = w_real.shape[0]
    c2 = 2 * cout
    cp = _round_up(c2, 128)             # lane-dense channel padding (>=128)

    hp = h + 2 * pad
    oh = hp - kh + 1                    # stride-1 output spatial size
    ow = (w + 2 * pad) - kw + 1
    owa = _round_up(ow, 8)              # sublane-aligned output width
    kw2 = kw * 2 * cin                  # folded contraction size
    m = n * oh * ow                     # true element count per channel (BN)

    # Conv bias cancels exactly under training-mode batch-norm (mean
    # subtraction), so it is intentionally NOT applied in the Pallas path.
    del b_real, b_imag

    # --- glue: complex-channel NHWC, zero-pad, width-only im2col, bf16 ------
    x_nhwc = jnp.concatenate([x[..., 0], x[..., 1]], axis=1)   # (N, 2Cin, H, W)
    x_nhwc = x_nhwc.transpose(0, 2, 3, 1)                      # (N, H, W, 2Cin)
    wtot = owa + kw - 1                                        # padded width
    x_pad = jnp.pad(
        x_nhwc, ((0, 0), (pad, pad), (pad, wtot - w - pad), (0, 0)))
    x_w = jnp.concatenate(                                     # width im2col
        [x_pad[:, :, v:v + owa, :] for v in range(kw)],
        axis=-1).astype(jnp.bfloat16)                          # (N,Hp,OWa,KW2)

    # Combined complex weight per row tap, width taps folded into K:
    #   per (u,v) tap  W_uv = [[Wr, Wi], [-Wi, Wr]]  (2Cin, 2Cout)
    wr = w_real.transpose(2, 3, 1, 0)                          # (kh,kw,Cin,Cout)
    wi = w_imag.transpose(2, 3, 1, 0)
    w_tap = jnp.concatenate(
        [jnp.concatenate([wr, wi], axis=3),
         jnp.concatenate([-wi, wr], axis=3)], axis=2)          # (kh,kw,2Cin,2Cout)
    w_fold = w_tap.reshape(kh, kw2, c2)                        # K order matches x_w
    w_fold = jnp.pad(w_fold, ((0, 0), (0, 0), (0, cp - c2))).astype(jnp.bfloat16)

    # --- tiling: TRH output image rows per grid step (<=128 matmul rows) ----
    trh = _largest_divisor_leq(oh, max(1, 128 // owa))
    n_ht = oh // trh
    rows = trh * owa                    # output rows (matmul M) per grid step
    g = n * n_ht                        # total number of (image, row-tile) blocks

    # --- Pallas kernel 1: complex conv + fused per-tile BN partials ---------
    kernel1 = functools.partial(_cconv_stats_kernel, kh=kh, trh=trh,
                                owa=owa, ow=ow, cp=cp)
    y, psum, psq = pl.pallas_call(
        kernel1,
        out_shape=(jax.ShapeDtypeStruct((g * rows, cp), jnp.bfloat16),
                   jax.ShapeDtypeStruct((g, 1, cp), jnp.float32),
                   jax.ShapeDtypeStruct((g, 1, cp), jnp.float32)),
        grid_spec=pltpu.PrefetchScalarGridSpec(
            num_scalar_prefetch=0,
            grid=(n, n_ht),
            in_specs=[
                # whole image; index constant over j -> DMA'd once per image
                pl.BlockSpec((1, hp, owa, kw2), lambda i, j: (i, 0, 0, 0)),
                pl.BlockSpec((kh, kw2, cp), lambda i, j: (0, 0, 0)),
            ],
            out_specs=(
                pl.BlockSpec((rows, cp), lambda i, j: (i * n_ht + j, 0)),
                pl.BlockSpec((1, 1, cp), lambda i, j: (i * n_ht + j, 0, 0)),
                pl.BlockSpec((1, 1, cp), lambda i, j: (i * n_ht + j, 0, 0)),
            ),
        ),
        compiler_params=pltpu.CompilerParams(
            dimension_semantics=("parallel", "parallel")),
    )(x_w, w_fold)

    # --- glue: fold global batch stats into a per-channel affine ------------
    col_sum = jnp.sum(psum[:, 0, :], axis=0)                   # (Cp,)
    col_sq = jnp.sum(psq[:, 0, :], axis=0)                     # (Cp,)
    mean = col_sum / m
    var = jnp.maximum(col_sq / m - mean * mean, 0.0)           # biased variance
    gamma = jnp.pad(jnp.concatenate([gamma_r, gamma_i]), (0, cp - c2))
    beta = jnp.pad(jnp.concatenate([beta_r, beta_i]), (0, cp - c2))
    scale = gamma * jax.lax.rsqrt(var + eps)
    shift = beta - mean * scale
    scale2 = scale.reshape(1, cp)
    shift2 = shift.reshape(1, cp)

    # --- Pallas kernel 2: normalize + ReLU over the flat slab ---------------
    gtot = g * rows                                            # = n*oh*OWa
    tr2 = _largest_multiple_divisor_leq(gtot, rows, 2048)      # >=512 when possible
    out_flat = pl.pallas_call(
        _bn_relu_kernel,
        out_shape=jax.ShapeDtypeStruct((gtot, cp), jnp.float32),
        grid_spec=pltpu.PrefetchScalarGridSpec(
            num_scalar_prefetch=0,
            grid=(gtot // tr2,),
            in_specs=[
                pl.BlockSpec((tr2, cp), lambda r: (r, 0)),
                pl.BlockSpec((1, cp), lambda r: (0, 0)),
                pl.BlockSpec((1, cp), lambda r: (0, 0)),
            ],
            out_specs=pl.BlockSpec((tr2, cp), lambda r: (r, 0)),
        ),
        compiler_params=pltpu.CompilerParams(
            dimension_semantics=("parallel",)),
    )(y, scale2, shift2)

    # --- glue: back to PyTorch layout [N, Cout, Hout, Wout, 2] --------------
    # Columns are [real Cout | imag Cout]; splitting c2 -> (2, Cout) keeps
    # index 0 = real, 1 = imag, which becomes the trailing complex axis.
    out = out_flat.reshape(n, oh, owa, cp)[:, :, :ow, :c2]
    out = out.reshape(n, oh, ow, 2, cout)
    return out.transpose(0, 4, 1, 2, 3)


# ------------------------------ reference ------------------------------------

def _reference(x, w_real, w_imag, b_real, b_imag,
               gamma_r, beta_r, gamma_i, beta_i, pad=1, eps=1e-5):
    xr, xi = x[..., 0], x[..., 1]

    def conv(inp, wgt, b):
        y = jax.lax.conv_general_dilated(
            inp, wgt, window_strides=(1, 1), padding=[(pad, pad), (pad, pad)],
            dimension_numbers=("NCHW", "OIHW", "NCHW"))
        return y + b[None, :, None, None]

    cr = conv(xr, w_real, b_real) - conv(xi, w_imag, b_imag)
    ci = conv(xr, w_imag, b_imag) + conv(xi, w_real, b_real)

    def bn(v, g, b):
        mu = v.mean(axis=(0, 2, 3), keepdims=True)
        var = v.var(axis=(0, 2, 3), keepdims=True)
        return g[None, :, None, None] * (v - mu) / jnp.sqrt(var + eps) \
            + b[None, :, None, None]

    return jnp.maximum(jnp.stack([bn(cr, gamma_r, beta_r),
                                  bn(ci, gamma_i, beta_i)], axis=-1), 0.0)


# -------------------------------- main ----------------------------------------

if __name__ == "__main__":
    N, CIN, COUT, H, W = 2, 4, 8, 16, 16
    KH = KW = 3
    key = jax.random.PRNGKey(0)
    ks = jax.random.split(key, 9)

    x = jax.random.normal(ks[0], (N, CIN, H, W, 2), dtype=jnp.float32)
    w_real = jax.random.normal(ks[1], (COUT, CIN, KH, KW), jnp.float32) * 0.1
    w_imag = jax.random.normal(ks[2], (COUT, CIN, KH, KW), jnp.float32) * 0.1
    b_real = jax.random.normal(ks[3], (COUT,), jnp.float32) * 0.1
    b_imag = jax.random.normal(ks[4], (COUT,), jnp.float32) * 0.1
    gamma_r = 1.0 + 0.1 * jax.random.normal(ks[5], (COUT,), jnp.float32)
    beta_r = 0.1 * jax.random.normal(ks[6], (COUT,), jnp.float32)
    gamma_i = 1.0 + 0.1 * jax.random.normal(ks[7], (COUT,), jnp.float32)
    beta_i = 0.1 * jax.random.normal(ks[8], (COUT,), jnp.float32)

    out = complex_conv_block(x, w_real, w_imag, b_real, b_imag,
                             gamma_r, beta_r, gamma_i, beta_i,
                             kh=KH, kw=KW, pad=1)
    out = jax.block_until_ready(out)

    ref = _reference(x, w_real, w_imag, b_real, b_imag,
                     gamma_r, beta_r, gamma_i, beta_i, pad=1)
    assert out.shape == (N, COUT, H, W, 2), out.shape
    # Tolerance loosened vs pure-f32: bf16 MXU operands (f32 accumulation) and
    # a bf16 intermediate y between the conv and the normalize/ReLU pass.
    assert jnp.allclose(out, ref, atol=3e-2, rtol=2e-2), \
        float(jnp.max(jnp.abs(out - ref)))

    print("KERNEL_OK")
</pallas_src>

<mosaic_0001>
module attributes {stable_mosaic.version = 11 : i64} {
  func.func @_cconv_stats_kernel(%arg0: i32, %arg1: i32, %arg2: memref<1x18x16x24xbf16, #tpu.memory_space<vmem>>, %arg3: memref<3x24x128xbf16, #tpu.memory_space<vmem>>, %arg4: memref<128x128xbf16, #tpu.memory_space<vmem>>, %arg5: memref<1x1x128xf32, #tpu.memory_space<vmem>>, %arg6: memref<1x1x128xf32, #tpu.memory_space<vmem>>) attributes {dimension_semantics = [#tpu.dimension_semantics<parallel>, #tpu.dimension_semantics<parallel>], iteration_bounds = array<i64: 2, 2>, scalar_prefetch = 0 : i64, scratch_operands = 0 : i64, tpu.core_type = #tpu.core_type<tc>, window_params = [{transform_indices = @transform_0, window_bounds = array<i64: 1, 18, 16, 24>}, {pipeline_mode = #tpu.pipeline_mode<synchronous>, transform_indices = @transform_1, window_bounds = array<i64: 3, 24, 128>}, {transform_indices = @transform_2, window_bounds = array<i64: 128, 128>}, {transform_indices = @transform_3, window_bounds = array<i64: 1, 1, 128>}, {transform_indices = @transform_4, window_bounds = array<i64: 1, 1, 128>}]} {
    %c8_i32 = arith.constant 8 : i32
    %0 = arith.muli %arg1, %c8_i32 : i32
    %1 = tpu.assume_multiple %0, 8 : i32
    %cst = arith.constant 0.000000e+00 : f32
    %2 = vector.broadcast %cst : f32 to vector<128x128xf32>
    %c0_i32 = arith.constant 0 : i32
    %3 = arith.addi %1, %c0_i32 : i32
    %c0 = arith.constant 0 : index
    %4 = arith.index_cast %3 : i32 to index
    %c0_0 = arith.constant 0 : index
    %c0_1 = arith.constant 0 : index
    %5 = vector.load %arg2[%c0, %4, %c0_0, %c0_1] : memref<1x18x16x24xbf16, #tpu.memory_space<vmem>>, vector<1x8x16x24xbf16>
    %6 = vector.shape_cast %5 : vector<1x8x16x24xbf16> to vector<8x16x24xbf16>
    %7 = vector.shape_cast %6 : vector<8x16x24xbf16> to vector<128x24xbf16>
    %c0_2 = arith.constant 0 : index
    %c0_3 = arith.constant 0 : index
    %c0_4 = arith.constant 0 : index
    %8 = vector.load %arg3[%c0_2, %c0_3, %c0_4] : memref<3x24x128xbf16, #tpu.memory_space<vmem>>, vector<1x24x128xbf16>
    %9 = vector.shape_cast %8 : vector<1x24x128xbf16> to vector<24x128xbf16>
    %cst_5 = arith.constant dense<0.000000e+00> : vector<128x128xf32>
    %10 = tpu.matmul %7, %9, %cst_5 {dimension_numbers = #tpu.dot_dimension_numbers<[1], [0], [0], [1], [0, 0, 1, 1], [], []>} : vector<128x24xbf16>, vector<24x128xbf16>, vector<128x128xf32> -> vector<128x128xf32>
    %11 = arith.addf %2, %10 : vector<128x128xf32>
    %c1_i32 = arith.constant 1 : i32
    %12 = arith.addi %1, %c1_i32 : i32
    %c0_6 = arith.constant 0 : index
    %13 = arith.index_cast %12 : i32 to index
    %c0_7 = arith.constant 0 : index
    %c0_8 = arith.constant 0 : index
    %14 = vector.load %arg2[%c0_6, %13, %c0_7, %c0_8] : memref<1x18x16x24xbf16, #tpu.memory_space<vmem>>, vector<1x8x16x24xbf16>
    %15 = vector.shape_cast %14 : vector<1x8x16x24xbf16> to vector<8x16x24xbf16>
    %16 = vector.shape_cast %15 : vector<8x16x24xbf16> to vector<128x24xbf16>
    %c1 = arith.constant 1 : index
    %c0_9 = arith.constant 0 : index
    %c0_10 = arith.constant 0 : index
    %17 = vector.load %arg3[%c1, %c0_9, %c0_10] : memref<3x24x128xbf16, #tpu.memory_space<vmem>>, vector<1x24x128xbf16>
    %18 = vector.shape_cast %17 : vector<1x24x128xbf16> to vector<24x128xbf16>
    %cst_11 = arith.constant dense<0.000000e+00> : vector<128x128xf32>
    %19 = tpu.matmul %16, %18, %cst_11 {dimension_numbers = #tpu.dot_dimension_numbers<[1], [0], [0], [1], [0, 0, 1, 1], [], []>} : vector<128x24xbf16>, vector<24x128xbf16>, vector<128x128xf32> -> vector<128x128xf32>
    %20 = arith.addf %11, %19 : vector<128x128xf32>
    %c2_i32 = arith.constant 2 : i32
    %21 = arith.addi %1, %c2_i32 : i32
    %c0_12 = arith.constant 0 : index
    %22 = arith.index_cast %21 : i32 to index
    %c0_13 = arith.constant 0 : index
    %c0_14 = arith.constant 0 : index
    %23 = vector.load %arg2[%c0_12, %22, %c0_13, %c0_14] : memref<1x18x16x24xbf16, #tpu.memory_space<vmem>>, vector<1x8x16x24xbf16>
    %24 = vector.shape_cast %23 : vector<1x8x16x24xbf16> to vector<8x16x24xbf16>
    %25 = vector.shape_cast %24 : vector<8x16x24xbf16> to vector<128x24xbf16>
    %c2 = arith.constant 2 : index
    %c0_15 = arith.constant 0 : index
    %c0_16 = arith.constant 0 : index
    %26 = vector.load %arg3[%c2, %c0_15, %c0_16] : memref<3x24x128xbf16, #tpu.memory_space<vmem>>, vector<1x24x128xbf16>
    %27 = vector.shape_cast %26 : vector<1x24x128xbf16> to vector<24x128xbf16>
    %cst_17 = arith.constant dense<0.000000e+00> : vector<128x128xf32>
    %28 = tpu.matmul %25, %27, %cst_17 {dimension_numbers = #tpu.dot_dimension_numbers<[1], [0], [0], [1], [0, 0, 1, 1], [], []>} : vector<128x24xbf16>, vector<24x128xbf16>, vector<128x128xf32> -> vector<128x128xf32>
    %29 = arith.addf %20, %28 : vector<128x128xf32>
    %30 = arith.truncf %29 : vector<128x128xf32> to vector<128x128xbf16>
    %c0_18 = arith.constant 0 : index
    %c0_19 = arith.constant 0 : index
    %31 = vector.load %arg4[%c0_18, %c0_19] : memref<128x128xbf16, #tpu.memory_space<vmem>>, vector<128x128xbf16>
    tpu.vector_store %arg4[%c0_18, %c0_19], %30 {strides = array<i32>} : memref<128x128xbf16, #tpu.memory_space<vmem>>, vector<128x128xbf16>,
    %cst_20 = arith.constant dense<0.000000e+00> : vector<128xf32>
    %32 = vector.multi_reduction <add>, %29, %cst_20 [0] : vector<128x128xf32> to vector<128xf32>
    %33 = vector.shape_cast %32 : vector<128xf32> to vector<1x128xf32>
    %34 = vector.shape_cast %33 : vector<1x128xf32> to vector<1x1x128xf32>
    %c0_21 = arith.constant 0 : index
    %c0_22 = arith.constant 0 : index
    %c0_23 = arith.constant 0 : index
    %35 = vector.load %arg5[%c0_21, %c0_22, %c0_23] : memref<1x1x128xf32, #tpu.memory_space<vmem>>, vector<1x1x128xf32>
    tpu.vector_store %arg5[%c0_21, %c0_22, %c0_23], %34 {strides = array<i32>} : memref<1x1x128xf32, #tpu.memory_space<vmem>>, vector<1x1x128xf32>,
    %36 = arith.mulf %29, %29 : vector<128x128xf32>
    %cst_24 = arith.constant dense<0.000000e+00> : vector<128xf32>
    %37 = vector.multi_reduction <add>, %36, %cst_24 [0] : vector<128x128xf32> to vector<128xf32>
    %38 = vector.shape_cast %37 : vector<128xf32> to vector<1x128xf32>
    %39 = vector.shape_cast %38 : vector<1x128xf32> to vector<1x1x128xf32>
    %c0_25 = arith.constant 0 : index
    %c0_26 = arith.constant 0 : index
    %c0_27 = arith.constant 0 : index
    %40 = vector.load %arg6[%c0_25, %c0_26, %c0_27] : memref<1x1x128xf32, #tpu.memory_space<vmem>>, vector<1x1x128xf32>
    tpu.vector_store %arg6[%c0_25, %c0_26, %c0_27], %39 {strides = array<i32>} : memref<1x1x128xf32, #tpu.memory_space<vmem>>, vector<1x1x128xf32>,
    return
  }
  func.func @transform_0(%arg0: i32, %arg1: i32) -> (i32, i32, i32, i32) {
    %c0_i32 = arith.constant 0 : i32
    %c0_i32_0 = arith.constant 0 : i32
    %c0_i32_1 = arith.constant 0 : i32
    %c0_i32_2 = arith.constant 0 : i32
    return %arg0, %c0_i32, %c0_i32_0, %c0_i32_1 : i32, i32, i32, i32
  }
  func.func @transform_1(%arg0: i32, %arg1: i32) -> (i32, i32, i32) {
    %c0_i32 = arith.constant 0 : i32
    %c0_i32_0 = arith.constant 0 : i32
    %c0_i32_1 = arith.constant 0 : i32
    %c0_i32_2 = arith.constant 0 : i32
    return %c0_i32, %c0_i32_0, %c0_i32_1 : i32, i32, i32
  }
  func.func @transform_2(%arg0: i32, %arg1: i32) -> (i32, i32) {
    %c2_i32 = arith.constant 2 : i32
    %0 = arith.muli %arg0, %c2_i32 : i32
    %1 = arith.addi %0, %arg1 : i32
    %c0_i32 = arith.constant 0 : i32
    %c0_i32_0 = arith.constant 0 : i32
    return %1, %c0_i32 : i32, i32
  }
  func.func @transform_3(%arg0: i32, %arg1: i32) -> (i32, i32, i32) {
    %c2_i32 = arith.constant 2 : i32
    %0 = arith.muli %arg0, %c2_i32 : i32
    %1 = arith.addi %0, %arg1 : i32
    %c0_i32 = arith.constant 0 : i32
    %c0_i32_0 = arith.constant 0 : i32
    %c0_i32_1 = arith.constant 0 : i32
    return %1, %c0_i32, %c0_i32_0 : i32, i32, i32
  }
  func.func @transform_4(%arg0: i32, %arg1: i32) -> (i32, i32, i32) {
    %c2_i32 = arith.constant 2 : i32
    %0 = arith.muli %arg0, %c2_i32 : i32
    %1 = arith.addi %0, %arg1 : i32
    %c0_i32 = arith.constant 0 : i32
    %c0_i32_0 = arith.constant 0 : i32
    %c0_i32_1 = arith.constant 0 : i32
    return %1, %c0_i32, %c0_i32_0 : i32, i32, i32
  }
}

module attributes {stable_mosaic.version = 11 : i64} {
  func.func @_bn_relu_kernel(%arg0: i32, %arg1: memref<512x128xbf16, #tpu.memory_space<vmem>>, %arg2: memref<1x128xf32, #tpu.memory_space<vmem>>, %arg3: memref<1x128xf32, #tpu.memory_space<vmem>>, %arg4: memref<512x128xf32, #tpu.memory_space<vmem>>) attributes {dimension_semantics = [#tpu.dimension_semantics<parallel>], iteration_bounds = array<i64: 1>, scalar_prefetch = 0 : i64, scratch_operands = 0 : i64, tpu.core_type = #tpu.core_type<tc>, window_params = [{transform_indices = @transform_0, window_bounds = array<i64: 512, 128>}, {pipeline_mode = #tpu.pipeline_mode<synchronous>, transform_indices = @transform_1, window_bounds = array<i64: 1, 128>}, {pipeline_mode = #tpu.pipeline_mode<synchronous>, transform_indices = @transform_2, window_bounds = array<i64: 1, 128>}, {transform_indices = @transform_3, window_bounds = array<i64: 512, 128>}]} {
    %c0 = arith.constant 0 : index
    %c0_0 = arith.constant 0 : index
    %0 = vector.load %arg1[%c0, %c0_0] : memref<512x128xbf16, #tpu.memory_space<vmem>>, vector<512x128xbf16>
    %1 = arith.extf %0 : vector<512x128xbf16> to vector<512x128xf32>
    %c0_1 = arith.constant 0 : index
    %c0_2 = arith.constant 0 : index
    %2 = vector.load %arg2[%c0_1, %c0_2] : memref<1x128xf32, #tpu.memory_space<vmem>>, vector<1x128xf32>
    %3 = vector.broadcast %2 : vector<1x128xf32> to vector<512x128xf32>
    %4 = arith.mulf %1, %3 : vector<512x128xf32>
    %c0_3 = arith.constant 0 : index
    %c0_4 = arith.constant 0 : index
    %5 = vector.load %arg3[%c0_3, %c0_4] : memref<1x128xf32, #tpu.memory_space<vmem>>, vector<1x128xf32>
    %6 = vector.broadcast %5 : vector<1x128xf32> to vector<512x128xf32>
    %7 = arith.addf %4, %6 : vector<512x128xf32>
    %cst = arith.constant 0.000000e+00 : f32
    %8 = vector.broadcast %cst : f32 to vector<512x128xf32>
    %9 = arith.maximumf %7, %8 : vector<512x128xf32>
    %c0_5 = arith.constant 0 : index
    %c0_6 = arith.constant 0 : index
    %10 = vector.load %arg4[%c0_5, %c0_6] : memref<512x128xf32, #tpu.memory_space<vmem>>, vector<512x128xf32>
    tpu.vector_store %arg4[%c0_5, %c0_6], %9 {strides = array<i32>} : memref<512x128xf32, #tpu.memory_space<vmem>>, vector<512x128xf32>,
    return
  }
  func.func @transform_0(%arg0: i32) -> (i32, i32) {
    %c0_i32 = arith.constant 0 : i32
    %c0_i32_0 = arith.constant 0 : i32
    return %arg0, %c0_i32 : i32, i32
  }
  func.func @transform_1(%arg0: i32) -> (i32, i32) {
    %c0_i32 = arith.constant 0 : i32
    %c0_i32_0 = arith.constant 0 : i32
    %c0_i32_1 = arith.constant 0 : i32
    return %c0_i32, %c0_i32_0 : i32, i32
  }
  func.func @transform_2(%arg0: i32) -> (i32, i32) {
    %c0_i32 = arith.constant 0 : i32
    %c0_i32_0 = arith.constant 0 : i32
    %c0_i32_1 = arith.constant 0 : i32
    return %c0_i32, %c0_i32_0 : i32, i32
  }
  func.func @transform_3(%arg0: i32) -> (i32, i32) {
    %c0_i32 = arith.constant 0 : i32
    %c0_i32_0 = arith.constant 0 : i32
    return %arg0, %c0_i32 : i32, i32
  }
}

</mosaic_0001>

<llo_original>
// kernel: complex_conv_block.3
$region0: #{complex_conv_block.3}
  #allocation0 [shape = 'u32[]', space=smem, size = 0x4, offset = 0x4, fixed_abs, tag = 'smem constant byte address 0x4 - core index']
  #allocation1 [shape = 'u32[144,128]{1,0:T(1,128)}', space=vmem, size = 0x12000, scoped, tag = 'internal scratch']
  %s0 = inlined_call_operand.vmem [shape: bf16[512,128], index: 0, kind: input, shape index: {}]
  %s1 = inlined_call_operand.vmem [shape: f32[1,128], index: 1, kind: input, shape index: {}]
  %s2 = inlined_call_operand.vmem [shape: f32[1,128], index: 2, kind: input, shape index: {}]
  %s3 = inlined_call_operand.vmem [shape: f32[512,128], index: 3, kind: output, shape index: {}]
  %s4 = sld [smem:[#allocation0]]
  $region22: #{complex_conv_block.3} parent=0
    _
  %s6 = ssub.s32 1, %s4
  %s7 = scalar_select 0, %s6, %s4
  // Predicated region
  $region2: #{complex_conv_block.3} parent=0 // pred_check
    _
  $region3: #{complex_conv_block.3} parent=0 // pred_check_branch
    %9 = sbr.rel (0) target = $region5
  $region4: #{complex_conv_block.3} parent=0 // pred_region
    _
  $region5: #{complex_conv_block.3} parent=0 // pred_fallthru
    _
  // Predicated region
  $region6: #{complex_conv_block.3} parent=0 // pred_check
    _
  $region7: #{complex_conv_block.3} parent=0 // pred_check_branch
    %11 = sbr.rel (0) target = $region9
  $region8: #{complex_conv_block.3} parent=0 // pred_region
    _
  $region9: #{complex_conv_block.3} parent=0 // pred_fallthru
    _
  // Predicated region
  $region10: #{complex_conv_block.3} parent=0 // pred_check
    _
  $region11: #{complex_conv_block.3} parent=0 // pred_check_branch
    %13 = sbr.rel (0) target = $region13
  $region12: #{complex_conv_block.3} parent=0 // pred_region
    _
  $region13: #{complex_conv_block.3} parent=0 // pred_fallthru
    _
  %v14 = vld [vmem:[%s0] sm:$0xf]
  %v15 = vld [vmem:[%s0 + $0x4] sm:$0xf]
  %v16 = vld [vmem:[%s0 + $0x8] sm:$0xf]
  %v17 = vld [vmem:[%s0 + $0xc] sm:$0xf]
  %v18 = vld [vmem:[%s0 + $0x10] sm:$0xf]
  %v19 = vld [vmem:[%s0 + $0x14] sm:$0xf]
  %v20 = vld [vmem:[%s0 + $0x18] sm:$0xf]
  %v21 = vld [vmem:[%s0 + $0x1c] sm:$0xf]
  %v22 = vld [vmem:[%s0 + $0x20] sm:$0xf]
  %v23 = vld [vmem:[%s0 + $0x24] sm:$0xf]
  %v24 = vld [vmem:[%s0 + $0x28] sm:$0xf]
  %v25 = vld [vmem:[%s0 + $0x2c] sm:$0xf]
  %v26 = vld [vmem:[%s0 + $0x30] sm:$0xf]
  %v27 = vld [vmem:[%s0 + $0x34] sm:$0xf]
  %v28 = vld [vmem:[%s0 + $0x38] sm:$0xf]
  %v29 = vld [vmem:[%s0 + $0x3c] sm:$0xf]
  %v30 = vld [vmem:[%s0 + $0x40] sm:$0xf]
  %v31 = vld [vmem:[%s0 + $0x44] sm:$0xf]
  %v32 = vld [vmem:[%s0 + $0x48] sm:$0xf]
  %v33 = vld [vmem:[%s0 + $0x4c] sm:$0xf]
  %v34 = vld [vmem:[%s0 + $0x50] sm:$0xf]
  %v35 = vld [vmem:[%s0 + $0x54] sm:$0xf]
  %v36 = vld [vmem:[%s0 + $0x58] sm:$0xf]
  %v37 = vld [vmem:[%s0 + $0x5c] sm:$0xf]
  %v38 = vld [vmem:[%s0 + $0x60] sm:$0xf]
  %v39 = vld [vmem:[%s0 + $0x64] sm:$0xf]
  %v40 = vld [vmem:[%s0 + $0x68] sm:$0xf]
  %v41 = vld [vmem:[%s0 + $0x6c] sm:$0xf]
  %v42 = vld [vmem:[%s0 + $0x70] sm:$0xf]
  %v43 = vld [vmem:[%s0 + $0x74] sm:$0xf]
  %v44 = vld [vmem:[%s0 + $0x78] sm:$0xf]
  %v45 = vld [vmem:[%s0 + $0x7c] sm:$0xf]
  %v46 = vld [vmem:[%s0 + $0x80] sm:$0xf]
  %v47 = vld [vmem:[%s0 + $0x84] sm:$0xf]
  %v48 = vld [vmem:[%s0 + $0x88] sm:$0xf]
  %v49 = vld [vmem:[%s0 + $0x8c] sm:$0xf]
  %v50 = vld [vmem:[%s0 + $0x90] sm:$0xf]
  %v51 = vld [vmem:[%s0 + $0x94] sm:$0xf]
  %v52 = vld [vmem:[%s0 + $0x98] sm:$0xf]
  %v53 = vld [vmem:[%s0 + $0x9c] sm:$0xf]
  %v54 = vld [vmem:[%s0 + $0xa0] sm:$0xf]
  %v55 = vld [vmem:[%s0 + $0xa4] sm:$0xf]
  %v56 = vld [vmem:[%s0 + $0xa8] sm:$0xf]
  %v57 = vld [vmem:[%s0 + $0xac] sm:$0xf]
  %v58 = vld [vmem:[%s0 + $0xb0] sm:$0xf]
  %v59 = vld [vmem:[%s0 + $0xb4] sm:$0xf]
  %v60 = vld [vmem:[%s0 + $0xb8] sm:$0xf]
  %v61 = vld [vmem:[%s0 + $0xbc] sm:$0xf]
  %v62 = vld [vmem:[%s0 + $0xc0] sm:$0xf]
  %v63 = vld [vmem:[%s0 + $0xc4] sm:$0xf]
  %v64 = vld [vmem:[%s0 + $0xc8] sm:$0xf]
  %v65 = vld [vmem:[%s0 + $0xcc] sm:$0xf]
  %v66 = vld [vmem:[%s0 + $0xd0] sm:$0xf]
  %v67 = vld [vmem:[%s0 + $0xd4] sm:$0xf]
  %v68 = vld [vmem:[%s0 + $0xd8] sm:$0xf]
  %v69 = vld [vmem:[%s0 + $0xdc] sm:$0xf]
  %v70 = vld [vmem:[%s0 + $0xe0] sm:$0xf]
  %v71 = vld [vmem:[%s0 + $0xe4] sm:$0xf]
  %v72 = vld [vmem:[%s0 + $0xe8] sm:$0xf]
  %v73 = vld [vmem:[%s0 + $0xec] sm:$0xf]
  %v74 = vld [vmem:[%s0 + $0xf0] sm:$0xf]
  %v75 = vld [vmem:[%s0 + $0xf4] sm:$0xf]
  %v76 = vld [vmem:[%s0 + $0xf8] sm:$0xf]
  %v77 = vld [vmem:[%s0 + $0xfc] sm:$0xf]
  %v78 = vunpack.c.l.bf16 %v14
  %v79 = vunpack.c.l.bf16 %v15
  %v80 = vunpack.c.l.bf16 %v16
  %v81 = vunpack.c.l.bf16 %v17
  %v82 = vunpack.c.l.bf16 %v18
  %v83 = vunpack.c.l.bf16 %v19
  %v84 = vunpack.c.l.bf16 %v20
  %v85 = vunpack.c.l.bf16 %v21
  %v86 = vunpack.c.l.bf16 %v22
  %v87 = vunpack.c.l.bf16 %v23
  %v88 = vunpack.c.l.bf16 %v24
  %v89 = vunpack.c.l.bf16 %v25
  %v90 = vunpack.c.l.bf16 %v26
  %v91 = vunpack.c.l.bf16 %v27
  %v92 = vunpack.c.l.bf16 %v28
  %v93 = vunpack.c.l.bf16 %v29
  %v94 = vunpack.c.l.bf16 %v30
  %v95 = vunpack.c.l.bf16 %v31
  %v96 = vunpack.c.l.bf16 %v32
  %v97 = vunpack.c.l.bf16 %v33
  %v98 = vunpack.c.l.bf16 %v34
  %v99 = vunpack.c.l.bf16 %v35
  %v100 = vunpack.c.l.bf16 %v36
  %v101 = vunpack.c.l.bf16 %v37
  %v102 = vunpack.c.l.bf16 %v38
  %v103 = vunpack.c.l.bf16 %v39
  %v104 = vunpack.c.l.bf16 %v40
  %v105 = vunpack.c.l.bf16 %v41
  %v106 = vunpack.c.l.bf16 %v42
  %v107 = vunpack.c.l.bf16 %v43
  %v108 = vunpack.c.l.bf16 %v44
  %v109 = vunpack.c.l.bf16 %v45
  %v110 = vunpack.c.l.bf16 %v46
  %v111 = vunpack.c.l.bf16 %v47
  %v112 = vunpack.c.l.bf16 %v48
  %v113 = vunpack.c.l.bf16 %v49
  %v114 = vunpack.c.l.bf16 %v50
  %v115 = vunpack.c.l.bf16 %v51
  %v116 = vunpack.c.l.bf16 %v52
  %v117 = vunpack.c.l.bf16 %v53
  %v118 = vunpack.c.l.bf16 %v54
  %v119 = vunpack.c.l.bf16 %v55
  %v120 = vunpack.c.l.bf16 %v56
  %v121 = vunpack.c.l.bf16 %v57
  %v122 = vunpack.c.l.bf16 %v58
  %v123 = vunpack.c.l.bf16 %v59
  %v124 = vunpack.c.l.bf16 %v60
  %v125 = vunpack.c.l.bf16 %v61
  %v126 = vunpack.c.l.bf16 %v62
  %v127 = vunpack.c.l.bf16 %v63
  %v128 = vunpack.c.l.bf16 %v64
  %v129 = vunpack.c.l.bf16 %v65
  %v130 = vunpack.c.l.bf16 %v66
  %v131 = vunpack.c.l.bf16 %v67
  %v132 = vunpack.c.l.bf16 %v68
  %v133 = vunpack.c.l.bf16 %v69
  %v134 = vunpack.c.l.bf16 %v70
  %v135 = vunpack.c.l.bf16 %v71
  %v136 = vunpack.c.l.bf16 %v72
  %v137 = vunpack.c.l.bf16 %v73
  %v138 = vunpack.c.l.bf16 %v74
  %v139 = vunpack.c.l.bf16 %v75
  %v140 = vunpack.c.l.bf16 %v76
  %v141 = vunpack.c.l.bf16 %v77
  %v142 = vld [vmem:[%s1] sm:$0x1]
  %v144 = vlaneseq
  %v145 = vshrl.u32 %v144, 7
  %v146 = vsub.s32 0, %v145
  %v147 = vrot.slane %v142, %v146
  %v149 = vmul.f32 %v78, %v147
  %v150 = vmul.f32 %v79, %v147
  %v151 = vmul.f32 %v80, %v147
  %v152 = vmul.f32 %v81, %v147
  %v153 = vmul.f32 %v82, %v147
  %v154 = vmul.f32 %v83, %v147
  %v155 = vmul.f32 %v84, %v147
  %v156 = vmul.f32 %v85, %v147
  %v157 = vmul.f32 %v86, %v147
  %v158 = vmul.f32 %v87, %v147
  %v159 = vmul.f32 %v88, %v147
  %v160 = vmul.f32 %v89, %v147
  %v161 = vmul.f32 %v90, %v147
  %v162 = vmul.f32 %v91, %v147
  %v163 = vmul.f32 %v92, %v147
  %v164 = vmul.f32 %v93, %v147
  %v165 = vmul.f32 %v94, %v147
  %v166 = vmul.f32 %v95, %v147
  %v167 = vmul.f32 %v96, %v147
  %v168 = vmul.f32 %v97, %v147
  %v169 = vmul.f32 %v98, %v147
  %v170 = vmul.f32 %v99, %v147
  %v171 = vmul.f32 %v100, %v147
  %v172 = vmul.f32 %v101, %v147
  %v173 = vmul.f32 %v102, %v147
  %v174 = vmul.f32 %v103, %v147
  %v175 = vmul.f32 %v104, %v147
  %v176 = vmul.f32 %v105, %v147
  %v177 = vmul.f32 %v106, %v147
  %v178 = vmul.f32 %v107, %v147
  %v179 = vmul.f32 %v108, %v147
  %v180 = vmul.f32 %v109, %v147
  %v181 = vmul.f32 %v110, %v147
  %v182 = vmul.f32 %v111, %v147
  %v183 = vmul.f32 %v112, %v147
  %v184 = vmul.f32 %v113, %v147
  %v185 = vmul.f32 %v114, %v147
  %v186 = vmul.f32 %v115, %v147
  %v187 = vmul.f32 %v116, %v147
  %v188 = vmul.f32 %v117, %v147
  %v189 = vmul.f32 %v118, %v147
  %v190 = vmul.f32 %v119, %v147
  %v191 = vmul.f32 %v120, %v147
  %v192 = vmul.f32 %v121, %v147
  %v193 = vmul.f32 %v122, %v147
  %v194 = vmul.f32 %v123, %v147
  %v195 = vmul.f32 %v124, %v147
  %v196 = vmul.f32 %v125, %v147
  %v197 = vmul.f32 %v126, %v147
  %v198 = vmul.f32 %v127, %v147
  %v199 = vmul.f32 %v128, %v147
  %v200 = vmul.f32 %v129, %v147
  %v201 = vmul.f32 %v130, %v147
  %v202 = vmul.f32 %v131, %v147
  %v203 = vmul.f32 %v132, %v147
  %v204 = vmul.f32 %v133, %v147
  %v205 = vmul.f32 %v134, %v147
  %v206 = vmul.f32 %v135, %v147
  %v207 = vmul.f32 %v136, %v147
  %v208 = vmul.f32 %v137, %v147
  %v209 = vmul.f32 %v138, %v147
  %v210 = vmul.f32 %v139, %v147
  %v211 = vmul.f32 %v140, %v147
  %v212 = vmul.f32 %v141, %v147
  %v213 = vld [vmem:[%s2] sm:$0x1]
  %v215 = vlaneseq
  %v216 = vshrl.u32 %v215, 7
  %v217 = vsub.s32 0, %v216
  %v218 = vrot.slane %v213, %v217
  %v220 = vadd.f32 %v149, %v218
  %v221 = vadd.f32 %v150, %v218
  %v222 = vadd.f32 %v151, %v218
  %v223 = vadd.f32 %v152, %v218
  %v224 = vadd.f32 %v153, %v218
  %v225 = vadd.f32 %v154, %v218
  %v226 = vadd.f32 %v155, %v218
  %v227 = vadd.f32 %v156, %v218
  %v228 = vadd.f32 %v157, %v218
  %v229 = vadd.f32 %v158, %v218
  %v230 = vadd.f32 %v159, %v218
  %v231 = vadd.f32 %v160, %v218
  %v232 = vadd.f32 %v161, %v218
  %v233 = vadd.f32 %v162, %v218
  %v234 = vadd.f32 %v163, %v218
  %v235 = vadd.f32 %v164, %v218
  %v236 = vadd.f32 %v165, %v218
  %v237 = vadd.f32 %v166, %v218
  %v238 = vadd.f32 %v167, %v218
  %v239 = vadd.f32 %v168, %v218
  %v240 = vadd.f32 %v169, %v218
  %v241 = vadd.f32 %v170, %v218
  %v242 = vadd.f32 %v171, %v218
  %v243 = vadd.f32 %v172, %v218
  %v244 = vadd.f32 %v173, %v218
  %v245 = vadd.f32 %v174, %v218
  %v246 = vadd.f32 %v175, %v218
  %v247 = vadd.f32 %v176, %v218
  %v248 = vadd.f32 %v177, %v218
  %v249 = vadd.f32 %v178, %v218
  %v250 = vadd.f32 %v179, %v218
  %v251 = vadd.f32 %v180, %v218
  %v252 = vadd.f32 %v181, %v218
  %v253 = vadd.f32 %v182, %v218
  %v254 = vadd.f32 %v183, %v218
  %v255 = vadd.f32 %v184, %v218
  %v256 = vadd.f32 %v185, %v218
  %v257 = vadd.f32 %v186, %v218
  %v258 = vadd.f32 %v187, %v218
  %v259 = vadd.f32 %v188, %v218
  %v260 = vadd.f32 %v189, %v218
  %v261 = vadd.f32 %v190, %v218
  %v262 = vadd.f32 %v191, %v218
  %v263 = vadd.f32 %v192, %v218
  %v264 = vadd.f32 %v193, %v218
  %v265 = vadd.f32 %v194, %v218
  %v266 = vadd.f32 %v195, %v218
  %v267 = vadd.f32 %v196, %v218
  %v268 = vadd.f32 %v197, %v218
  %v269 = vadd.f32 %v198, %v218
  %v270 = vadd.f32 %v199, %v218
  %v271 = vadd.f32 %v200, %v218
  %v272 = vadd.f32 %v201, %v218
  %v273 = vadd.f32 %v202, %v218
  %v274 = vadd.f32 %v203, %v218
  %v275 = vadd.f32 %v204, %v218
  %v276 = vadd.f32 %v205, %v218
  %v277 = vadd.f32 %v206, %v218
  %v278 = vadd.f32 %v207, %v218
  %v279 = vadd.f32 %v208, %v218
  %v280 = vadd.f32 %v209, %v218
  %v281 = vadd.f32 %v210, %v218
  %v282 = vadd.f32 %v211, %v218
  %v283 = vadd.f32 %v212, %v218
  %v284 = vmax.f32 %v220, 0.0
  %v285 = vmax.f32 %v221, 0.0
  %v286 = vmax.f32 %v222, 0.0
  %v287 = vmax.f32 %v223, 0.0
  %v288 = vmax.f32 %v224, 0.0
  %v289 = vmax.f32 %v225, 0.0
  %v290 = vmax.f32 %v226, 0.0
  %v291 = vmax.f32 %v227, 0.0
  %v292 = vmax.f32 %v228, 0.0
  %v293 = vmax.f32 %v229, 0.0
  %v294 = vmax.f32 %v230, 0.0
  %v295 = vmax.f32 %v231, 0.0
  %v296 = vmax.f32 %v232, 0.0
  %v297 = vmax.f32 %v233, 0.0
  %v298 = vmax.f32 %v234, 0.0
  %v299 = vmax.f32 %v235, 0.0
  %v300 = vmax.f32 %v236, 0.0
  %v301 = vmax.f32 %v237, 0.0
  %v302 = vmax.f32 %v238, 0.0
  %v303 = vmax.f32 %v239, 0.0
  %v304 = vmax.f32 %v240, 0.0
  %v305 = vmax.f32 %v241, 0.0
  %v306 = vmax.f32 %v242, 0.0
  %v307 = vmax.f32 %v243, 0.0
  %v308 = vmax.f32 %v244, 0.0
  %v309 = vmax.f32 %v245, 0.0
  %v310 = vmax.f32 %v246, 0.0
  %v311 = vmax.f32 %v247, 0.0
  %v312 = vmax.f32 %v248, 0.0
  %v313 = vmax.f32 %v249, 0.0
  %v314 = vmax.f32 %v250, 0.0
  %v315 = vmax.f32 %v251, 0.0
  %v316 = vmax.f32 %v252, 0.0
  %v317 = vmax.f32 %v253, 0.0
  %v318 = vmax.f32 %v254, 0.0
  %v319 = vmax.f32 %v255, 0.0
  %v320 = vmax.f32 %v256, 0.0
  %v321 = vmax.f32 %v257, 0.0
  %v322 = vmax.f32 %v258, 0.0
  %v323 = vmax.f32 %v259, 0.0
  %v324 = vmax.f32 %v260, 0.0
  %v325 = vmax.f32 %v261, 0.0
  %v326 = vmax.f32 %v262, 0.0
  %v327 = vmax.f32 %v263, 0.0
  %v328 = vmax.f32 %v264, 0.0
  %v329 = vmax.f32 %v265, 0.0
  %v330 = vmax.f32 %v266, 0.0
  %v331 = vmax.f32 %v267, 0.0
  %v332 = vmax.f32 %v268, 0.0
  %v333 = vmax.f32 %v269, 0.0
  %v334 = vmax.f32 %v270, 0.0
  %v335 = vmax.f32 %v271, 0.0
  %v336 = vmax.f32 %v272, 0.0
  %v337 = vmax.f32 %v273, 0.0
  %v338 = vmax.f32 %v274, 0.0
  %v339 = vmax.f32 %v275, 0.0
  %v340 = vmax.f32 %v276, 0.0
  %v341 = vmax.f32 %v277, 0.0
  %v342 = vmax.f32 %v278, 0.0
  %v343 = vmax.f32 %v279, 0.0
  %v344 = vmax.f32 %v280, 0.0
  %v345 = vmax.f32 %v281, 0.0
  %v346 = vmax.f32 %v282, 0.0
  %v347 = vmax.f32 %v283, 0.0
  %348 = vst [vmem:[%s3] sm:$0xff] %v284
  %349 = vst [vmem:[%s3 + $0x8] sm:$0xff] %v285
  %350 = vst [vmem:[%s3 + $0x10] sm:$0xff] %v286
  %351 = vst [vmem:[%s3 + $0x18] sm:$0xff] %v287
  %352 = vst [vmem:[%s3 + $0x20] sm:$0xff] %v288
  %353 = vst [vmem:[%s3 + $0x28] sm:$0xff] %v289
  %354 = vst [vmem:[%s3 + $0x30] sm:$0xff] %v290
  %355 = vst [vmem:[%s3 + $0x38] sm:$0xff] %v291
  %356 = vst [vmem:[%s3 + $0x40] sm:$0xff] %v292
  %357 = vst [vmem:[%s3 + $0x48] sm:$0xff] %v293
  %358 = vst [vmem:[%s3 + $0x50] sm:$0xff] %v294
  %359 = vst [vmem:[%s3 + $0x58] sm:$0xff] %v295
  %360 = vst [vmem:[%s3 + $0x60] sm:$0xff] %v296
  %361 = vst [vmem:[%s3 + $0x68] sm:$0xff] %v297
  %362 = vst [vmem:[%s3 + $0x70] sm:$0xff] %v298
  %363 = vst [vmem:[%s3 + $0x78] sm:$0xff] %v299
  %364 = vst [vmem:[%s3 + $0x80] sm:$0xff] %v300
  %365 = vst [vmem:[%s3 + $0x88] sm:$0xff] %v301
  %366 = vst [vmem:[%s3 + $0x90] sm:$0xff] %v302
  %367 = vst [vmem:[%s3 + $0x98] sm:$0xff] %v303
  %368 = vst [vmem:[%s3 + $0xa0] sm:$0xff] %v304
  %369 = vst [vmem:[%s3 + $0xa8] sm:$0xff] %v305
  %370 = vst [vmem:[%s3 + $0xb0] sm:$0xff] %v306
  %371 = vst [vmem:[%s3 + $0xb8] sm:$0xff] %v307
  %372 = vst [vmem:[%s3 + $0xc0] sm:$0xff] %v308
  %373 = vst [vmem:[%s3 + $0xc8] sm:$0xff] %v309
  %374 = vst [vmem:[%s3 + $0xd0] sm:$0xff] %v310
  %375 = vst [vmem:[%s3 + $0xd8] sm:$0xff] %v311
  %376 = vst [vmem:[%s3 + $0xe0] sm:$0xff] %v312
  %377 = vst [vmem:[%s3 + $0xe8] sm:$0xff] %v313
  %378 = vst [vmem:[%s3 + $0xf0] sm:$0xff] %v314
  %379 = vst [vmem:[%s3 + $0xf8] sm:$0xff] %v315
  %380 = vst [vmem:[%s3 + $0x100] sm:$0xff] %v316
  %381 = vst [vmem:[%s3 + $0x108] sm:$0xff] %v317
  %382 = vst [vmem:[%s3 + $0x110] sm:$0xff] %v318
  %383 = vst [vmem:[%s3 + $0x118] sm:$0xff] %v319
  %384 = vst [vmem:[%s3 + $0x120] sm:$0xff] %v320
  %385 = vst [vmem:[%s3 + $0x128] sm:$0xff] %v321
  %386 = vst [vmem:[%s3 + $0x130] sm:$0xff] %v322
  %387 = vst [vmem:[%s3 + $0x138] sm:$0xff] %v323
  %388 = vst [vmem:[%s3 + $0x140] sm:$0xff] %v324
  %389 = vst [vmem:[%s3 + $0x148] sm:$0xff] %v325
  %390 = vst [vmem:[%s3 + $0x150] sm:$0xff] %v326
  %391 = vst [vmem:[%s3 + $0x158] sm:$0xff] %v327
  %392 = vst [vmem:[%s3 + $0x160] sm:$0xff] %v328
  %393 = vst [vmem:[%s3 + $0x168] sm:$0xff] %v329
  %394 = vst [vmem:[%s3 + $0x170] sm:$0xff] %v330
  %395 = vst [vmem:[%s3 + $0x178] sm:$0xff] %v331
  %396 = vst [vmem:[%s3 + $0x180] sm:$0xff] %v332
  %397 = vst [vmem:[%s3 + $0x188] sm:$0xff] %v333
  %398 = vst [vmem:[%s3 + $0x190] sm:$0xff] %v334
  %399 = vst [vmem:[%s3 + $0x198] sm:$0xff] %v335
  %400 = vst [vmem:[%s3 + $0x1a0] sm:$0xff] %v336
  %401 = vst [vmem:[%s3 + $0x1a8] sm:$0xff] %v337
  %402 = vst [vmem:[%s3 + $0x1b0] sm:$0xff] %v338
  %403 = vst [vmem:[%s3 + $0x1b8] sm:$0xff] %v339
  %404 = vst [vmem:[%s3 + $0x1c0] sm:$0xff] %v340
  %405 = vst [vmem:[%s3 + $0x1c8] sm:$0xff] %v341
  %406 = vst [vmem:[%s3 + $0x1d0] sm:$0xff] %v342
  %407 = vst [vmem:[%s3 + $0x1d8] sm:$0xff] %v343
  %408 = vst [vmem:[%s3 + $0x1e0] sm:$0xff] %v344
  %409 = vst [vmem:[%s3 + $0x1e8] sm:$0xff] %v345
  %410 = vst [vmem:[%s3 + $0x1f0] sm:$0xff] %v346
  %411 = vst [vmem:[%s3 + $0x1f8] sm:$0xff] %v347
  // Predicated region
  $region14: #{complex_conv_block.3} parent=0 // pred_check
    _
  $region15: #{complex_conv_block.3} parent=0 // pred_check_branch
    %413 = sbr.rel (0) target = $region17
  $region16: #{complex_conv_block.3} parent=0 // pred_region
    _
  $region17: #{complex_conv_block.3} parent=0 // pred_fallthru
    _
  // Predicated region
  $region18: #{complex_conv_block.3} parent=0 // pred_check
    _
  $region19: #{complex_conv_block.3} parent=0 // pred_check_branch
    %415 = sbr.rel (0) target = $region21
  $region20: #{complex_conv_block.3} parent=0 // pred_region
    _
  $region21: #{complex_conv_block.3} parent=0 // pred_fallthru
    _

// kernel: complex_conv_block.2
$region0: #{complex_conv_block.2}
  #allocation0 [shape = 'u32[]', space=smem, size = 0x4, offset = 0x4, fixed_abs, tag = 'smem constant byte address 0x4 - core index']
  #allocation1 [shape = 'u32[144,128]{1,0:T(1,128)}', space=vmem, size = 0x12000, scoped, tag = 'internal scratch']
  %s0 = inlined_call_operand.vmem [shape: bf16[2,18,16,24], index: 0, kind: input, shape index: {}]
  %s1 = inlined_call_operand.vmem [shape: bf16[3,24,128], index: 1, kind: input, shape index: {}]
  %s2 = inlined_call_operand.vmem [shape: bf16[512,128], index: 2, kind: output, shape index: {0}]
  %s3 = inlined_call_operand.vmem [shape: f32[4,1,128], index: 3, kind: output, shape index: {1}]
  %s4 = inlined_call_operand.vmem [shape: f32[4,1,128], index: 4, kind: output, shape index: {2}]
  %5 = xla_tuple %s2, %s3, %s4
  %s6 = sld [smem:[#allocation0]]
  $region57: #{complex_conv_block.2} parent=0
    _
  %s8 = ssub.s32 1, %s6
  %s9 = scalar_select 0, %s8, %s6
  loop: start=0, step=1, limit=6
  $region2: #{complex_conv_block.2} parent=0 // loop_pre_header
    _
  $region3: #{complex_conv_block.2} parent=0 // loop_header
    %s11 = sphi 0, %s15
    %p12 = scmp.ge.s32.totalorder %s11, 6
    %s18 = sphi 0, %s30
    %s19 = sphi 0, %s26
    %s20 = sphi 0, %s18
    %s21 = sphi 0, %s19
    %s22 = sphi 0, %s20
    %s23 = sphi 0, %s21
    %s33 = sphi 0, %s35
    %s36 = sphi 0, %s33
    %s37 = sphi 0, %s36
    %s53 = sphi 0, %s37
    %s57 = sphi 0, %s57
    %s59 = sphi 0, %s57
    %s60 = sphi 0, %s59
    %s74 = sphi 0, %s60
    %s84 = sphi 0, %s86
    %s87 = sphi 0, %s84
    %s88 = sphi 0, %s87
    %s104 = sphi 0, %s88
    %s114 = sphi 0, %s116
    %s117 = sphi 0, %s114
    %s118 = sphi 0, %s117
    %s134 = sphi 0, %s118
    %s144 = sphi 0, %s146
    %s147 = sphi 0, %s144
    %s148 = sphi 0, %s147
    %s164 = sphi 0, %s148
  $region4: #{complex_conv_block.2} parent=0 // loop_header_branch
    %14 = sbr.rel (%p12) target = $region8
  $region5: #{complex_conv_block.2} parent=0 // loop_body
    %s16 = ssub.s32 %s11, 1
    %s17 = ssub.s32 %s11, 2
    %s24 = sadd.s32 1, %s19
    %p25 = scmp.ge.s32.totalorder %s24, 2
    %s26 = scalar_select %p25, 0, %s24
    %s27 = sadd.s32 1, %s18
    %s28 = scalar_select %p25, %s27, %s18
    %p29 = scmp.ge.s32.totalorder %s28, 2
    %s30 = scalar_select %p29, 0, %s28
    %s31 = ssub.s32 %s18, %s30
    %p32 = scmp.eq.s32.totalorder %s31, 0
    %s34 = sadd.s32 %s33, 1
    %s35 = scalar_select %p32, %s33, %s34
    %p38 = pneg %p32
    %p39 = scmp.eq.s32.totalorder %s11, 3
    %p40 = por %p38, %p39
    %p41 = scmp.ne.s32.totalorder %s33, %s36
    %p42 = scmp.eq.s32.totalorder %s11, 0
    %p43 = por %p41, %p42
    %p44 = scmp.ne.s32.totalorder %s33, %s36
    %p45 = scmp.eq.s32.totalorder %s16, 3
    %p46 = por %p44, %p45
    %p47 = scmp.ne.s32.totalorder %s36, %s37
    %p48 = scmp.eq.s32.totalorder %s16, 0
    %p49 = por %p47, %p48
    %p50 = scmp.ne.s32.totalorder %s36, %s37
    %p51 = scmp.eq.s32.totalorder %s17, 3
    %p52 = por %p50, %p51
    %p54 = scmp.ne.s32.totalorder %s37, %s53
    %p55 = scmp.eq.s32.totalorder %s17, 0
    %p56 = por %p54, %p55
    %s58 = sadd.s32 %s57, 1
    %p61 = scmp.eq.s32.totalorder %s11, 3
    %p62 = scmp.ne.s32.totalorder %s57, %s59
    %p63 = scmp.eq.s32.totalorder %s11, 0
    %p64 = por %p62, %p63
    %p65 = scmp.ne.s32.totalorder %s57, %s59
    %p66 = scmp.eq.s32.totalorder %s16, 3
    %p67 = por %p65, %p66
    %p68 = scmp.ne.s32.totalorder %s59, %s60
    %p69 = scmp.eq.s32.totalorder %s16, 0
    %p70 = por %p68, %p69
    %p71 = scmp.ne.s32.totalorder %s59, %s60
    %p72 = scmp.eq.s32.totalorder %s17, 3
    %p73 = por %p71, %p72
    %p75 = scmp.ne.s32.totalorder %s60, %s74
    %p76 = scmp.eq.s32.totalorder %s17, 0
    %p77 = por %p75, %p76
    %s78 = smul.u32 %s18, 2
    %s79 = sadd.s32 %s78, %s19
    %s80 = smul.u32 %s30, 2
    %s81 = sadd.s32 %s80, %s26
    %s82 = ssub.s32 %s79, %s81
    %p83 = scmp.eq.s32.totalorder %s82, 0
    %s85 = sadd.s32 %s84, 1
    %s86 = scalar_select %p83, %s84, %s85
    %p89 = pneg %p83
    %p90 = scmp.eq.s32.totalorder %s11, 3
    %p91 = por %p89, %p90
    %p92 = scmp.ne.s32.totalorder %s84, %s87
    %p93 = scmp.eq.s32.totalorder %s11, 0
    %p94 = por %p92, %p93
    %p95 = scmp.ne.s32.totalorder %s84, %s87
    %p96 = scmp.eq.s32.totalorder %s16, 3
    %p97 = por %p95, %p96
    %p98 = scmp.ne.s32.totalorder %s87, %s88
    %p99 = scmp.eq.s32.totalorder %s16, 0
    %p100 = por %p98, %p99
    %p101 = scmp.ne.s32.totalorder %s87, %s88
    %p102 = scmp.eq.s32.totalorder %s17, 3
    %p103 = por %p101, %p102
    %p105 = scmp.ne.s32.totalorder %s88, %s104
    %p106 = scmp.eq.s32.totalorder %s17, 0
    %p107 = por %p105, %p106
    %s108 = smul.u32 %s18, 2
    %s109 = sadd.s32 %s108, %s19
    %s110 = smul.u32 %s30, 2
    %s111 = sadd.s32 %s110, %s26
    %s112 = ssub.s32 %s109, %s111
    %p113 = scmp.eq.s32.totalorder %s112, 0
    %s115 = sadd.s32 %s114, 1
    %s116 = scalar_select %p113, %s114, %s115
    %p119 = pneg %p113
    %p120 = scmp.eq.s32.totalorder %s11, 3
    %p121 = por %p119, %p120
    %p122 = scmp.ne.s32.totalorder %s114, %s117
    %p123 = scmp.eq.s32.totalorder %s11, 0
    %p124 = por %p122, %p123
    %p125 = scmp.ne.s32.totalorder %s114, %s117
    %p126 = scmp.eq.s32.totalorder %s16, 3
    %p127 = por %p125, %p126
    %p128 = scmp.ne.s32.totalorder %s117, %s118
    %p129 = scmp.eq.s32.totalorder %s16, 0
    %p130 = por %p128, %p129
    %p131 = scmp.ne.s32.totalorder %s117, %s118
    %p132 = scmp.eq.s32.totalorder %s17, 3
    %p133 = por %p131, %p132
    %p135 = scmp.ne.s32.totalorder %s118, %s134
    %p136 = scmp.eq.s32.totalorder %s17, 0
    %p137 = por %p135, %p136
    %s138 = smul.u32 %s18, 2
    %s139 = sadd.s32 %s138, %s19
    %s140 = smul.u32 %s30, 2
    %s141 = sadd.s32 %s140, %s26
    %s142 = ssub.s32 %s139, %s141
    %p143 = scmp.eq.s32.totalorder %s142, 0
    %s145 = sadd.s32 %s144, 1
    %s146 = scalar_select %p143, %s144, %s145
    %p149 = pneg %p143
    %p150 = scmp.eq.s32.totalorder %s11, 3
    %p151 = por %p149, %p150
    %p152 = scmp.ne.s32.totalorder %s144, %s147
    %p153 = scmp.eq.s32.totalorder %s11, 0
    %p154 = por %p152, %p153
    %p155 = scmp.ne.s32.totalorder %s144, %s147
    %p156 = scmp.eq.s32.totalorder %s16, 3
    %p157 = por %p155, %p156
    %p158 = scmp.ne.s32.totalorder %s147, %s148
    %p159 = scmp.eq.s32.totalorder %s16, 0
    %p160 = por %p158, %p159
    %p161 = scmp.ne.s32.totalorder %s147, %s148
    %p162 = scmp.eq.s32.totalorder %s17, 3
    %p163 = por %p161, %p162
    %p165 = scmp.ne.s32.totalorder %s148, %s164
    %p166 = scmp.eq.s32.totalorder %s17, 0
    %p167 = por %p165, %p166
    %p168 = scmp.le.s32.totalorder 1, %s11
    %p169 = scmp.lt.s32.totalorder %s11, 5
    %p170 = pnand %p168, %p169
    %p171 = pneg %p170
    // Predicated region
    $region9: #{complex_conv_block.2} parent=5 // pred_check
      _
    $region10: #{complex_conv_block.2} parent=5 // pred_check_branch
      %173 = sbr.rel (%p170) target = $region12
    $region11: #{complex_conv_block.2} parent=5 // pred_region
      %s174 = ssub.s32 %s11, 1
      // Predicated region
      $region13: #{complex_conv_block.2} parent=11 // pred_check
        %p175 = pneg %p70
      $region14: #{complex_conv_block.2} parent=11 // pred_check_branch
        %177 = sbr.rel (%p175) target = $region16
      $region15: #{complex_conv_block.2} parent=11 // pred_region
        _
      $region16: #{complex_conv_block.2} parent=11 // pred_fallthru
        _
    $region12: #{complex_conv_block.2} parent=5 // pred_fallthru
      _
    %p178 = scmp.lt.s32.totalorder %s11, 4
    // Predicated region
    $region17: #{complex_conv_block.2} parent=5 // pred_check
      %p179 = pneg %p178
    $region18: #{complex_conv_block.2} parent=5 // pred_check_branch
      %181 = sbr.rel (%p179) target = $region20
    $region19: #{complex_conv_block.2} parent=5 // pred_region
      // Predicated region
      $region21: #{complex_conv_block.2} parent=19 // pred_check
        %p182 = pneg %p43
      $region22: #{complex_conv_block.2} parent=19 // pred_check_branch
        %184 = sbr.rel (%p182) target = $region24
      $region23: #{complex_conv_block.2} parent=19 // pred_region
        %p185 = scmp.lt.s32.totalorder %s18, 1
        %s186 = scalar_select %p185, %s18, 1
        %s187 = smul.addr %s186, 36
        %s188 = smul.addr %s187, 4
        %s189 = scalar_lea.vmem %s0, %s188
      $region24: #{complex_conv_block.2} parent=19 // pred_fallthru
        _
    $region20: #{complex_conv_block.2} parent=5 // pred_fallthru
      _
    %p190 = scmp.le.s32.totalorder 1, %s11
    %p191 = scmp.lt.s32.totalorder %s11, 5
    %p192 = pnand %p190, %p191
    %p193 = pneg %p192
    // Predicated region
    $region25: #{complex_conv_block.2} parent=5 // pred_check
      _
    $region26: #{complex_conv_block.2} parent=5 // pred_check_branch
      %195 = sbr.rel (%p192) target = $region28
    $region27: #{complex_conv_block.2} parent=5 // pred_region
      %s196 = ssub.s32 %s11, 1
      %p197 = scmp.lt.s32.totalorder %s20, 1
      %s198 = scalar_select %p197, %s20, 1
      %s199 = smul.addr %s198, 36
      %s200 = smul.addr %s199, 4
      %s201 = scalar_lea.vmem %s0, %s200
      %p202 = pneg %p49
      %p203 = pneg %p46
      %p204 = pneg %p70
      %p205 = pneg %p67
      %p206 = pneg %p100
      %p207 = pneg %p97
      %s208 = smul.u32 %s20, 2
      %s209 = sadd.s32 %s208, %s21
      %s210 = smul.u32 16, %s209
      %p211 = scmp.lt.s32.totalorder %s210, 63
      %s212 = scalar_select %p211, %s210, 63
      %s213 = smul.addr %s212, 4
      %s214 = scalar_lea.vmem %s2, %s213
      %p215 = pneg %p130
      %p216 = pneg %p127
      %s217 = smul.u32 %s20, 2
      %s218 = sadd.s32 %s217, %s21
      %p219 = scmp.lt.s32.totalorder %s218, 3
      %s220 = scalar_select %p219, %s218, 3
      %s221 = scalar_lea.vmem %s3, %s220
      %p222 = pneg %p160
      %p223 = pneg %p157
      %s224 = smul.u32 %s20, 2
      %s225 = sadd.s32 %s224, %s21
      %p226 = scmp.lt.s32.totalorder %s225, 3
      %s227 = scalar_select %p226, %s225, 3
      %s228 = scalar_lea.vmem %s4, %s227
      %p229 = scmp.lt.s32.totalorder %s20, 1
      %s230 = scalar_select %p229, %s20, 1
      %s231 = smul.addr %s230, 36
      %s232 = smul.addr %s231, 4
      %s233 = scalar_lea.vmem %s0, %s232
      %s234 = smul.u32 %s20, 2
      %s235 = sadd.s32 %s234, %s21
      %s236 = smul.u32 16, %s235
      %p237 = scmp.lt.s32.totalorder %s236, 63
      %s238 = scalar_select %p237, %s236, 63
      %s239 = smul.addr %s238, 4
      %s240 = scalar_lea.vmem %s2, %s239
      %s241 = smul.u32 %s20, 2
      %s242 = sadd.s32 %s241, %s21
      %s243 = smul.u32 16, %s242
      %s244 = smul.u32 %s20, 2
      %s245 = sadd.s32 %s244, %s21
      %p246 = scmp.lt.s32.totalorder %s245, 3
      %s247 = scalar_select %p246, %s245, 3
      %s248 = scalar_lea.vmem %s3, %s247
      %s249 = smul.u32 %s20, 2
      %s250 = sadd.s32 %s249, %s21
      %s251 = smul.u32 %s20, 2
      %s252 = sadd.s32 %s251, %s21
      %p253 = scmp.lt.s32.totalorder %s252, 3
      %s254 = scalar_select %p253, %s252, 3
      %s255 = scalar_lea.vmem %s4, %s254
      %s256 = smul.u32 %s20, 2
      %s257 = sadd.s32 %s256, %s21
      %s259 = smul.u32 %s21, 8
      %s260 = smul.u32 %s259, 2
      %s261 = smul.addr %s260, 4
      %s262 = scalar_lea.vmem %s233, %s261
      %v263 = vld [vmem:[%s262] sm:$0xf]
      %v264 = vld [vmem:[%s262 + $0x4] sm:$0xf]
      %v265 = vld [vmem:[%s262 + $0x8] sm:$0xf]
      %v266 = vld [vmem:[%s262 + $0xc] sm:$0xf]
      %v267 = vld [vmem:[%s262 + $0x10] sm:$0xf]
      %v268 = vld [vmem:[%s262 + $0x14] sm:$0xf]
      %v269 = vld [vmem:[%s262 + $0x18] sm:$0xf]
      %v270 = vld [vmem:[%s262 + $0x1c] sm:$0xf]
      %v271 = vld [vmem:[%s262 + $0x20] sm:$0xf]
      %v272 = vld [vmem:[%s262 + $0x24] sm:$0xf]
      %v273 = vld [vmem:[%s262 + $0x28] sm:$0xf]
      %v274 = vld [vmem:[%s262 + $0x2c] sm:$0xf]
      %v275 = vld [vmem:[%s262 + $0x30] sm:$0xf]
      %v276 = vld [vmem:[%s262 + $0x34] sm:$0xf]
      %v277 = vld [vmem:[%s262 + $0x38] sm:$0xf]
      %v278 = vld [vmem:[%s262 + $0x3c] sm:$0xf]
      %v279 = vld [vmem:[%s1] sm:$0xf]
      %v280 = vld [vmem:[%s1 + $0x4] sm:$0xf]
      %v281 = vld [vmem:[%s1 + $0x8] sm:$0xf]
      %s282 = sadd.s32 %s259, 1
      %s283 = smul.u32 %s282, 2
      %s284 = smul.addr %s283, 4
      %s285 = scalar_lea.vmem %s233, %s284
      %v286 = vld [vmem:[%s285] sm:$0xf]
      %v287 = vld [vmem:[%s285 + $0x4] sm:$0xf]
      %v288 = vld [vmem:[%s285 + $0x8] sm:$0xf]
      %v289 = vld [vmem:[%s285 + $0xc] sm:$0xf]
      %v290 = vld [vmem:[%s285 + $0x10] sm:$0xf]
      %v291 = vld [vmem:[%s285 + $0x14] sm:$0xf]
      %v292 = vld [vmem:[%s285 + $0x18] sm:$0xf]
      %v293 = vld [vmem:[%s285 + $0x1c] sm:$0xf]
      %v294 = vld [vmem:[%s285 + $0x20] sm:$0xf]
      %v295 = vld [vmem:[%s285 + $0x24] sm:$0xf]
      %v296 = vld [vmem:[%s285 + $0x28] sm:$0xf]
      %v297 = vld [vmem:[%s285 + $0x2c] sm:$0xf]
      %v298 = vld [vmem:[%s285 + $0x30] sm:$0xf]
      %v299 = vld [vmem:[%s285 + $0x34] sm:$0xf]
      %v300 = vld [vmem:[%s285 + $0x38] sm:$0xf]
      %v301 = vld [vmem:[%s285 + $0x3c] sm:$0xf]
      %s302 = scalar_lea.vmem %s1, 12
      %v303 = vld [vmem:[%s302] sm:$0xf]
      %v304 = vld [vmem:[%s302 + $0x4] sm:$0xf]
      %v305 = vld [vmem:[%s302 + $0x8] sm:$0xf]
      %v322 = vunpack.c.l.b16 %v286
      %v323 = vunpack.c.l.b16 %v287
      %v324 = vunpack.c.l.b16 %v288
      %v325 = vunpack.c.l.b16 %v289
      %v326 = vunpack.c.l.b16 %v290
      %v327 = vunpack.c.l.b16 %v291
      %v328 = vunpack.c.l.b16 %v292
      %v329 = vunpack.c.l.b16 %v293
      %v330 = vunpack.c.l.b16 %v294
      %v331 = vunpack.c.l.b16 %v295
      %v332 = vunpack.c.l.b16 %v296
      %v333 = vunpack.c.l.b16 %v297
      %v334 = vunpack.c.l.b16 %v298
      %v335 = vunpack.c.l.b16 %v299
      %v336 = vunpack.c.l.b16 %v300
      %v337 = vunpack.c.l.b16 %v301
      %v338 = vpack.c.b16 %v323, %v322
      %v339 = vpack.c.b16 %v325, %v324
      %v340 = vpack.c.b16 %v327, %v326
      %v341 = vpack.c.b16 %v329, %v328
      %v342 = vpack.c.b16 %v331, %v330
      %v343 = vpack.c.b16 %v333, %v332
      %v344 = vpack.c.b16 %v335, %v334
      %v345 = vpack.c.b16 %v337, %v336
      %v349 = vunpack.c.l.b16 %v303
      %v350 = vunpack.c.l.b16 %v304
      %v351 = vunpack.c.l.b16 %v305
      %v352 = vpack.c.b16 %v350, %v349
      %v353 = vpack.c.b16 %v351, %v351
      %vm355 = vcmask 195584
      %v357 = vsel %vm355, %v338, 0
      %v360 = vsel %vm355, %v339, 0
      %v363 = vsel %vm355, %v340, 0
      %v366 = vsel %vm355, %v341, 0
      %v369 = vsel %vm355, %v342, 0
      %v372 = vsel %vm355, %v343, 0
      %v375 = vsel %vm355, %v344, 0
      %v378 = vsel %vm355, %v345, 0
      %vm380 = vcmask 1043456
      %v382 = vsel %vm380, %v353, 0
      %384 = vmatprep.subr.bf16.mxu0 0
      %385 = vmatpush1.bf16.msra.mxu0 %v352
      %386 = vmatprep.subr.bf16.mxu0 0
      %387 = vmatpush1.bf16.msra.mxu0 %v382
      %388 = vmatprep.subr.bf16.mxu0 0
      %389 = vmatpush1.bf16.msra.mxu0 0
      %390 = vmatprep.subr.bf16.mxu0 0
      %391 = vmatpush1.bf16.msra.mxu0 0
      %392 = vmatprep.subr.bf16.mxu0 0
      %393 = vmatpush1.bf16.msra.mxu0 0
      %394 = vmatprep.subr.bf16.mxu0 0
      %395 = vmatpush1.bf16.msra.mxu0 0
      %396 = vmatprep.subr.bf16.mxu0 0
      %397 = vmatpush1.bf16.msra.mxu0 0
      %398 = vmatprep.subr.bf16.mxu0 0
      %399 = vmatpush1.bf16.msra.mxu0 0
      %400 = vmatprep.subr.bf16.mxu0 0
      %401 = vmatpush1.bf16.msra.mxu0 0
      %402 = vmatprep.subr.bf16.mxu0 0
      %403 = vmatpush1.bf16.msra.mxu0 0
      %404 = vmatprep.subr.bf16.mxu0 0
      %405 = vmatpush1.bf16.msra.mxu0 0
      %406 = vmatprep.subr.bf16.mxu0 0
      %407 = vmatpush1.bf16.msra.mxu0 0
      %408 = vmatprep.subr.bf16.mxu0 0
      %409 = vmatpush1.bf16.msra.mxu0 0
      %410 = vmatprep.subr.bf16.mxu0 0
      %411 = vmatpush1.bf16.msra.mxu0 0
      %412 = vmatprep.subr.bf16.mxu0 0
      %413 = vmatpush1.bf16.msra.mxu0 0
      %414 = vmatprep.subr.bf16.mxu0 0
      %415 = vmatpush1.bf16.msra.mxu0 0
      %416 = vmatprep.mubr.bf16.mxu0 0
      %417 = vmatmul.mubr.bf16.gmra.mrb[0].mxu0 %v357
      %v418 = vpop.f32.mrb[0].mxu0
      %v419 = vadd.f32 0.0, %v418
      %v420 = vpop.f32.mrb[0].mxu0
      %v421 = vpop.f32.mrb[0].mxu0
      %v422 = vadd.f32 0.0, %v421
      %v423 = vpop.f32.mrb[0].mxu0
      %424 = vmatprep.mubr.bf16.mxu0 0
      %425 = vmatmul.mubr.bf16.gmra.mrb[0].mxu0 %v360
      %v426 = vpop.f32.mrb[0].mxu0
      %v427 = vadd.f32 0.0, %v426
      %v428 = vpop.f32.mrb[0].mxu0
      %v429 = vpop.f32.mrb[0].mxu0
      %v430 = vadd.f32 0.0, %v429
      %v431 = vpop.f32.mrb[0].mxu0
      %432 = vmatprep.mubr.bf16.mxu0 0
      %433 = vmatmul.mubr.bf16.gmra.mrb[0].mxu0 %v363
      %v434 = vpop.f32.mrb[0].mxu0
      %v435 = vadd.f32 0.0, %v434
      %v436 = vpop.f32.mrb[0].mxu0
      %v437 = vpop.f32.mrb[0].mxu0
      %v438 = vadd.f32 0.0, %v437
      %v439 = vpop.f32.mrb[0].mxu0
      %440 = vmatprep.mubr.bf16.mxu0 0
      %441 = vmatmul.mubr.bf16.gmra.mrb[0].mxu0 %v366
      %v442 = vpop.f32.mrb[0].mxu0
      %v443 = vadd.f32 0.0, %v442
      %v444 = vpop.f32.mrb[0].mxu0
      %v445 = vpop.f32.mrb[0].mxu0
      %v446 = vadd.f32 0.0, %v445
      %v447 = vpop.f32.mrb[0].mxu0
      %448 = vmatprep.mubr.bf16.mxu0 0
      %449 = vmatmul.mubr.bf16.gmra.mrb[0].mxu0 %v369
      %v450 = vpop.f32.mrb[0].mxu0
      %v451 = vadd.f32 0.0, %v450
      %v452 = vpop.f32.mrb[0].mxu0
      %v453 = vpop.f32.mrb[0].mxu0
      %v454 = vadd.f32 0.0, %v453
      %v455 = vpop.f32.mrb[0].mxu0
      %456 = vmatprep.mubr.bf16.mxu0 0
      %457 = vmatmul.mubr.bf16.gmra.mrb[0].mxu0 %v372
      %v458 = vpop.f32.mrb[0].mxu0
      %v459 = vadd.f32 0.0, %v458
      %v460 = vpop.f32.mrb[0].mxu0
      %v461 = vpop.f32.mrb[0].mxu0
      %v462 = vadd.f32 0.0, %v461
      %v463 = vpop.f32.mrb[0].mxu0
      %464 = vmatprep.mubr.bf16.mxu0 0
      %465 = vmatmul.mubr.bf16.gmra.mrb[0].mxu0 %v375
      %v466 = vpop.f32.mrb[0].mxu0
      %v467 = vadd.f32 0.0, %v466
      %v468 = vpop.f32.mrb[0].mxu0
      %v469 = vpop.f32.mrb[0].mxu0
      %v470 = vadd.f32 0.0, %v469
      %v471 = vpop.f32.mrb[0].mxu0
      %472 = vmatprep.mubr.bf16.mxu0 0
      %473 = vmatmul.mubr.bf16.gmra.mrb[0].mxu0 %v378
      %v474 = vpop.f32.mrb[0].mxu0
      %v475 = vadd.f32 0.0, %v474
      %v476 = vpop.f32.mrb[0].mxu0
      %v477 = vpop.f32.mrb[0].mxu0
      %v478 = vadd.f32 0.0, %v477
      %v479 = vpop.f32.mrb[0].mxu0
      %480 = vdwg.mxu0
      %v497 = vunpack.c.l.b16 %v263
      %v498 = vunpack.c.l.b16 %v264
      %v499 = vunpack.c.l.b16 %v265
      %v500 = vunpack.c.l.b16 %v266
      %v501 = vunpack.c.l.b16 %v267
      %v502 = vunpack.c.l.b16 %v268
      %v503 = vunpack.c.l.b16 %v269
      %v504 = vunpack.c.l.b16 %v270
      %v505 = vunpack.c.l.b16 %v271
      %v506 = vunpack.c.l.b16 %v272
      %v507 = vunpack.c.l.b16 %v273
      %v508 = vunpack.c.l.b16 %v274
      %v509 = vunpack.c.l.b16 %v275
      %v510 = vunpack.c.l.b16 %v276
      %v511 = vunpack.c.l.b16 %v277
      %v512 = vunpack.c.l.b16 %v278
      %v513 = vpack.c.b16 %v498, %v497
      %v514 = vpack.c.b16 %v500, %v499
      %v515 = vpack.c.b16 %v502, %v501
      %v516 = vpack.c.b16 %v504, %v503
      %v517 = vpack.c.b16 %v506, %v505
      %v518 = vpack.c.b16 %v508, %v507
      %v519 = vpack.c.b16 %v510, %v509
      %v520 = vpack.c.b16 %v512, %v511
      %v524 = vunpack.c.l.b16 %v279
      %v525 = vunpack.c.l.b16 %v280
      %v526 = vunpack.c.l.b16 %v281
      %v527 = vpack.c.b16 %v525, %v524
      %v528 = vpack.c.b16 %v526, %v526
      %v531 = vsel %vm355, %v513, 0
      %v534 = vsel %vm355, %v514, 0
      %v537 = vsel %vm355, %v515, 0
      %v540 = vsel %vm355, %v516, 0
      %v543 = vsel %vm355, %v517, 0
      %v546 = vsel %vm355, %v518, 0
      %v549 = vsel %vm355, %v519, 0
      %v552 = vsel %vm355, %v520, 0
      %v555 = vsel %vm380, %v528, 0
      %557 = vmatprep.subr.bf16.mxu0 0
      %558 = vmatpush1.bf16.msra.mxu0 %v527
      %559 = vmatprep.subr.bf16.mxu0 0
      %560 = vmatpush1.bf16.msra.mxu0 %v555
      %561 = vmatprep.subr.bf16.mxu0 0
      %562 = vmatpush1.bf16.msra.mxu0 0
      %563 = vmatprep.subr.bf16.mxu0 0
      %564 = vmatpush1.bf16.msra.mxu0 0
      %565 = vmatprep.subr.bf16.mxu0 0
      %566 = vmatpush1.bf16.msra.mxu0 0
      %567 = vmatprep.subr.bf16.mxu0 0
      %568 = vmatpush1.bf16.msra.mxu0 0
      %569 = vmatprep.subr.bf16.mxu0 0
      %570 = vmatpush1.bf16.msra.mxu0 0
      %571 = vmatprep.subr.bf16.mxu0 0
      %572 = vmatpush1.bf16.msra.mxu0 0
      %573 = vmatprep.subr.bf16.mxu0 0
      %574 = vmatpush1.bf16.msra.mxu0 0
      %575 = vmatprep.subr.bf16.mxu0 0
      %576 = vmatpush1.bf16.msra.mxu0 0
      %577 = vmatprep.subr.bf16.mxu0 0
      %578 = vmatpush1.bf16.msra.mxu0 0
      %579 = vmatprep.subr.bf16.mxu0 0
      %580 = vmatpush1.bf16.msra.mxu0 0
      %581 = vmatprep.subr.bf16.mxu0 0
      %582 = vmatpush1.bf16.msra.mxu0 0
      %583 = vmatprep.subr.bf16.mxu0 0
      %584 = vmatpush1.bf16.msra.mxu0 0
      %585 = vmatprep.subr.bf16.mxu0 0
      %586 = vmatpush1.bf16.msra.mxu0 0
      %587 = vmatprep.subr.bf16.mxu0 0
      %588 = vmatpush1.bf16.msra.mxu0 0
      %589 = vmatprep.mubr.bf16.mxu0 0
      %590 = vmatmul.mubr.bf16.gmra.mrb[0].mxu0 %v531
      %v591 = vpop.f32.mrb[0].mxu0
      %v592 = vadd.f32 %v419, %v591
      %v593 = vpop.f32.mrb[0].mxu0
      %v594 = vpop.f32.mrb[0].mxu0
      %v595 = vadd.f32 %v422, %v594
      %v596 = vpop.f32.mrb[0].mxu0
      %597 = vmatprep.mubr.bf16.mxu0 0
      %598 = vmatmul.mubr.bf16.gmra.mrb[0].mxu0 %v534
      %v599 = vpop.f32.mrb[0].mxu0
      %v600 = vadd.f32 %v427, %v599
      %v601 = vpop.f32.mrb[0].mxu0
      %v602 = vpop.f32.mrb[0].mxu0
      %v603 = vadd.f32 %v430, %v602
      %v604 = vpop.f32.mrb[0].mxu0
      %605 = vmatprep.mubr.bf16.mxu0 0
      %606 = vmatmul.mubr.bf16.gmra.mrb[0].mxu0 %v537
      %v607 = vpop.f32.mrb[0].mxu0
      %v608 = vadd.f32 %v435, %v607
      %v609 = vpop.f32.mrb[0].mxu0
      %v610 = vpop.f32.mrb[0].mxu0
      %v611 = vadd.f32 %v438, %v610
      %v612 = vpop.f32.mrb[0].mxu0
      %613 = vmatprep.mubr.bf16.mxu0 0
      %614 = vmatmul.mubr.bf16.gmra.mrb[0].mxu0 %v540
      %v615 = vpop.f32.mrb[0].mxu0
      %v616 = vadd.f32 %v443, %v615
      %v617 = vpop.f32.mrb[0].mxu0
      %v618 = vpop.f32.mrb[0].mxu0
      %v619 = vadd.f32 %v446, %v618
      %v620 = vpop.f32.mrb[0].mxu0
      %621 = vmatprep.mubr.bf16.mxu0 0
      %622 = vmatmul.mubr.bf16.gmra.mrb[0].mxu0 %v543
      %v623 = vpop.f32.mrb[0].mxu0
      %v624 = vadd.f32 %v451, %v623
      %v625 = vpop.f32.mrb[0].mxu0
      %v626 = vpop.f32.mrb[0].mxu0
      %v627 = vadd.f32 %v454, %v626
      %v628 = vpop.f32.mrb[0].mxu0
      %629 = vmatprep.mubr.bf16.mxu0 0
      %630 = vmatmul.mubr.bf16.gmra.mrb[0].mxu0 %v546
      %v631 = vpop.f32.mrb[0].mxu0
      %v632 = vadd.f32 %v459, %v631
      %v633 = vpop.f32.mrb[0].mxu0
      %v634 = vpop.f32.mrb[0].mxu0
      %v635 = vadd.f32 %v462, %v634
      %v636 = vpop.f32.mrb[0].mxu0
      %637 = vmatprep.mubr.bf16.mxu0 0
      %638 = vmatmul.mubr.bf16.gmra.mrb[0].mxu0 %v549
      %v639 = vpop.f32.mrb[0].mxu0
      %v640 = vadd.f32 %v467, %v639
      %v641 = vpop.f32.mrb[0].mxu0
      %v642 = vpop.f32.mrb[0].mxu0
      %v643 = vadd.f32 %v470, %v642
      %v644 = vpop.f32.mrb[0].mxu0
      %645 = vmatprep.mubr.bf16.mxu0 0
      %646 = vmatmul.mubr.bf16.gmra.mrb[0].mxu0 %v552
      %v647 = vpop.f32.mrb[0].mxu0
      %v648 = vadd.f32 %v475, %v647
      %v649 = vpop.f32.mrb[0].mxu0
      %v650 = vpop.f32.mrb[0].mxu0
      %v651 = vadd.f32 %v478, %v650
      %v652 = vpop.f32.mrb[0].mxu0
      %653 = vdwg.mxu0
      %s654 = sadd.s32 %s259, 2
      %s655 = smul.u32 %s654, 2
      %s656 = smul.addr %s655, 4
      %s657 = scalar_lea.vmem %s233, %s656
      %v658 = vld [vmem:[%s657] sm:$0xf]
      %v659 = vld [vmem:[%s657 + $0x4] sm:$0xf]
      %v660 = vld [vmem:[%s657 + $0x8] sm:$0xf]
      %v661 = vld [vmem:[%s657 + $0xc] sm:$0xf]
      %v662 = vld [vmem:[%s657 + $0x10] sm:$0xf]
      %v663 = vld [vmem:[%s657 + $0x14] sm:$0xf]
      %v664 = vld [vmem:[%s657 + $0x18] sm:$0xf]
      %v665 = vld [vmem:[%s657 + $0x1c] sm:$0xf]
      %v666 = vld [vmem:[%s657 + $0x20] sm:$0xf]
      %v667 = vld [vmem:[%s657 + $0x24] sm:$0xf]
      %v668 = vld [vmem:[%s657 + $0x28] sm:$0xf]
      %v669 = vld [vmem:[%s657 + $0x2c] sm:$0xf]
      %v670 = vld [vmem:[%s657 + $0x30] sm:$0xf]
      %v671 = vld [vmem:[%s657 + $0x34] sm:$0xf]
      %v672 = vld [vmem:[%s657 + $0x38] sm:$0xf]
      %v673 = vld [vmem:[%s657 + $0x3c] sm:$0xf]
      %s674 = scalar_lea.vmem %s1, 24
      %v675 = vld [vmem:[%s674] sm:$0xf]
      %v676 = vld [vmem:[%s674 + $0x4] sm:$0xf]
      %v677 = vld [vmem:[%s674 + $0x8] sm:$0xf]
      %v694 = vunpack.c.l.b16 %v658
      %v695 = vunpack.c.l.b16 %v659
      %v696 = vunpack.c.l.b16 %v660
      %v697 = vunpack.c.l.b16 %v661
      %v698 = vunpack.c.l.b16 %v662
      %v699 = vunpack.c.l.b16 %v663
      %v700 = vunpack.c.l.b16 %v664
      %v701 = vunpack.c.l.b16 %v665
      %v702 = vunpack.c.l.b16 %v666
      %v703 = vunpack.c.l.b16 %v667
      %v704 = vunpack.c.l.b16 %v668
      %v705 = vunpack.c.l.b16 %v669
      %v706 = vunpack.c.l.b16 %v670
      %v707 = vunpack.c.l.b16 %v671
      %v708 = vunpack.c.l.b16 %v672
      %v709 = vunpack.c.l.b16 %v673
      %v710 = vpack.c.b16 %v695, %v694
      %v711 = vpack.c.b16 %v697, %v696
      %v712 = vpack.c.b16 %v699, %v698
      %v713 = vpack.c.b16 %v701, %v700
      %v714 = vpack.c.b16 %v703, %v702
      %v715 = vpack.c.b16 %v705, %v704
      %v716 = vpack.c.b16 %v707, %v706
      %v717 = vpack.c.b16 %v709, %v708
      %v721 = vunpack.c.l.b16 %v675
      %v722 = vunpack.c.l.b16 %v676
      %v723 = vunpack.c.l.b16 %v677
      %v724 = vpack.c.b16 %v722, %v721
      %v725 = vpack.c.b16 %v723, %v723
      %v728 = vsel %vm355, %v710, 0
      %v731 = vsel %vm355, %v711, 0
      %v734 = vsel %vm355, %v712, 0
      %v737 = vsel %vm355, %v713, 0
      %v740 = vsel %vm355, %v714, 0
      %v743 = vsel %vm355, %v715, 0
      %v746 = vsel %vm355, %v716, 0
      %v749 = vsel %vm355, %v717, 0
      %v752 = vsel %vm380, %v725, 0
      %754 = vmatprep.subr.bf16.mxu0 0
      %755 = vmatpush1.bf16.msra.mxu0 %v724
      %756 = vmatprep.subr.bf16.mxu0 0
      %757 = vmatpush1.bf16.msra.mxu0 %v752
      %758 = vmatprep.subr.bf16.mxu0 0
      %759 = vmatpush1.bf16.msra.mxu0 0
      %760 = vmatprep.subr.bf16.mxu0 0
      %761 = vmatpush1.bf16.msra.mxu0 0
      %762 = vmatprep.subr.bf16.mxu0 0
      %763 = vmatpush1.bf16.msra.mxu0 0
      %764 = vmatprep.subr.bf16.mxu0 0
      %765 = vmatpush1.bf16.msra.mxu0 0
      %766 = vmatprep.subr.bf16.mxu0 0
      %767 = vmatpush1.bf16.msra.mxu0 0
      %768 = vmatprep.subr.bf16.mxu0 0
      %769 = vmatpush1.bf16.msra.mxu0 0
      %770 = vmatprep.subr.bf16.mxu0 0
      %771 = vmatpush1.bf16.msra.mxu0 0
      %772 = vmatprep.subr.bf16.mxu0 0
      %773 = vmatpush1.bf16.msra.mxu0 0
      %774 = vmatprep.subr.bf16.mxu0 0
      %775 = vmatpush1.bf16.msra.mxu0 0
      %776 = vmatprep.subr.bf16.mxu0 0
      %777 = vmatpush1.bf16.msra.mxu0 0
      %778 = vmatprep.subr.bf16.mxu0 0
      %779 = vmatpush1.bf16.msra.mxu0 0
      %780 = vmatprep.subr.bf16.mxu0 0
      %781 = vmatpush1.bf16.msra.mxu0 0
      %782 = vmatprep.subr.bf16.mxu0 0
      %783 = vmatpush1.bf16.msra.mxu0 0
      %784 = vmatprep.subr.bf16.mxu0 0
      %785 = vmatpush1.bf16.msra.mxu0 0
      %786 = vmatprep.mubr.bf16.mxu0 0
      %787 = vmatmul.mubr.bf16.gmra.mrb[0].mxu0 %v728
      %v788 = vpop.f32.mrb[0].mxu0
      %v789 = vadd.f32 0.0, %v788
      %v790 = vpop.f32.mrb[0].mxu0
      %v791 = vpop.f32.mrb[0].mxu0
      %v792 = vadd.f32 0.0, %v791
      %v793 = vpop.f32.mrb[0].mxu0
      %794 = vmatprep.mubr.bf16.mxu0 0
      %795 = vmatmul.mubr.bf16.gmra.mrb[0].mxu0 %v731
      %v796 = vpop.f32.mrb[0].mxu0
      %v797 = vadd.f32 0.0, %v796
      %v798 = vpop.f32.mrb[0].mxu0
      %v799 = vpop.f32.mrb[0].mxu0
      %v800 = vadd.f32 0.0, %v799
      %v801 = vpop.f32.mrb[0].mxu0
      %802 = vmatprep.mubr.bf16.mxu0 0
      %803 = vmatmul.mubr.bf16.gmra.mrb[0].mxu0 %v734
      %v804 = vpop.f32.mrb[0].mxu0
      %v805 = vadd.f32 0.0, %v804
      %v806 = vpop.f32.mrb[0].mxu0
      %v807 = vpop.f32.mrb[0].mxu0
      %v808 = vadd.f32 0.0, %v807
      %v809 = vpop.f32.mrb[0].mxu0
      %810 = vmatprep.mubr.bf16.mxu0 0
      %811 = vmatmul.mubr.bf16.gmra.mrb[0].mxu0 %v737
      %v812 = vpop.f32.mrb[0].mxu0
      %v813 = vadd.f32 0.0, %v812
      %v814 = vpop.f32.mrb[0].mxu0
      %v815 = vpop.f32.mrb[0].mxu0
      %v816 = vadd.f32 0.0, %v815
      %v817 = vpop.f32.mrb[0].mxu0
      %818 = vmatprep.mubr.bf16.mxu0 0
      %819 = vmatmul.mubr.bf16.gmra.mrb[0].mxu0 %v740
      %v820 = vpop.f32.mrb[0].mxu0
      %v821 = vadd.f32 0.0, %v820
      %v822 = vpop.f32.mrb[0].mxu0
      %v823 = vpop.f32.mrb[0].mxu0
      %v824 = vadd.f32 0.0, %v823
      %v825 = vpop.f32.mrb[0].mxu0
      %826 = vmatprep.mubr.bf16.mxu0 0
      %827 = vmatmul.mubr.bf16.gmra.mrb[0].mxu0 %v743
      %v828 = vpop.f32.mrb[0].mxu0
      %v829 = vadd.f32 0.0, %v828
      %v830 = vpop.f32.mrb[0].mxu0
      %v831 = vpop.f32.mrb[0].mxu0
      %v832 = vadd.f32 0.0, %v831
      %v833 = vpop.f32.mrb[0].mxu0
      %834 = vmatprep.mubr.bf16.mxu0 0
      %835 = vmatmul.mubr.bf16.gmra.mrb[0].mxu0 %v746
      %v836 = vpop.f32.mrb[0].mxu0
      %v837 = vadd.f32 0.0, %v836
      %v838 = vpop.f32.mrb[0].mxu0
      %v839 = vpop.f32.mrb[0].mxu0
      %v840 = vadd.f32 0.0, %v839
      %v841 = vpop.f32.mrb[0].mxu0
      %842 = vmatprep.mubr.bf16.mxu0 0
      %843 = vmatmul.mubr.bf16.gmra.mrb[0].mxu0 %v749
      %v844 = vpop.f32.mrb[0].mxu0
      %v845 = vadd.f32 0.0, %v844
      %v846 = vpop.f32.mrb[0].mxu0
      %v847 = vpop.f32.mrb[0].mxu0
      %v848 = vadd.f32 0.0, %v847
      %v849 = vpop.f32.mrb[0].mxu0
      %850 = vdwg.mxu0
      %v851 = vadd.f32 %v592, %v789
      %v852 = vadd.f32 %v595, %v792
      %v853 = vadd.f32 %v600, %v797
      %v854 = vadd.f32 %v603, %v800
      %v855 = vadd.f32 %v608, %v805
      %v856 = vadd.f32 %v611, %v808
      %v857 = vadd.f32 %v616, %v813
      %v858 = vadd.f32 %v619, %v816
      %v859 = vadd.f32 %v624, %v821
      %v860 = vadd.f32 %v627, %v824
      %v861 = vadd.f32 %v632, %v829
      %v862 = vadd.f32 %v635, %v832
      %v863 = vadd.f32 %v640, %v837
      %v864 = vadd.f32 %v643, %v840
      %v865 = vadd.f32 %v648, %v845
      %v866 = vadd.f32 %v651, %v848
      %v867 = vpack.c.bf16 %v852, %v851
      %v868 = vpack.c.bf16 %v854, %v853
      %v869 = vpack.c.bf16 %v856, %v855
      %v870 = vpack.c.bf16 %v858, %v857
      %v871 = vpack.c.bf16 %v860, %v859
      %v872 = vpack.c.bf16 %v862, %v861
      %v873 = vpack.c.bf16 %v864, %v863
      %v874 = vpack.c.bf16 %v866, %v865
      %v883 = vunpack.c.l.b16 %v867
      %v884 = vunpack.c.h.b16 %v867
      %v885 = vunpack.c.l.b16 %v868
      %v886 = vunpack.c.h.b16 %v868
      %v887 = vunpack.c.l.b16 %v869
      %v888 = vunpack.c.h.b16 %v869
      %v889 = vunpack.c.l.b16 %v870
      %v890 = vunpack.c.h.b16 %v870
      %v891 = vunpack.c.l.b16 %v871
      %v892 = vunpack.c.h.b16 %v871
      %v893 = vunpack.c.l.b16 %v872
      %v894 = vunpack.c.h.b16 %v872
      %v895 = vunpack.c.l.b16 %v873
      %v896 = vunpack.c.h.b16 %v873
      %v897 = vunpack.c.l.b16 %v874
      %v898 = vunpack.c.h.b16 %v874
      %v899 = vpack.c.b16 %v883, %v883
      %v900 = vpack.c.b16 %v884, %v884
      %v901 = vpack.c.b16 %v885, %v885
      %v902 = vpack.c.b16 %v886, %v886
      %v903 = vpack.c.b16 %v887, %v887
      %v904 = vpack.c.b16 %v888, %v888
      %v905 = vpack.c.b16 %v889, %v889
      %v906 = vpack.c.b16 %v890, %v890
      %v907 = vpack.c.b16 %v891, %v891
      %v908 = vpack.c.b16 %v892, %v892
      %v909 = vpack.c.b16 %v893, %v893
      %v910 = vpack.c.b16 %v894, %v894
      %v911 = vpack.c.b16 %v895, %v895
      %v912 = vpack.c.b16 %v896, %v896
      %v913 = vpack.c.b16 %v897, %v897
      %v914 = vpack.c.b16 %v898, %v898
      %931 = vst [vmem:[%s240] sm:$0xf] %v899
      %932 = vst [vmem:[%s240 + $0x4] sm:$0xf] %v900
      %933 = vst [vmem:[%s240 + $0x8] sm:$0xf] %v901
      %934 = vst [vmem:[%s240 + $0xc] sm:$0xf] %v902
      %935 = vst [vmem:[%s240 + $0x10] sm:$0xf] %v903
      %936 = vst [vmem:[%s240 + $0x14] sm:$0xf] %v904
      %937 = vst [vmem:[%s240 + $0x18] sm:$0xf] %v905
      %938 = vst [vmem:[%s240 + $0x1c] sm:$0xf] %v906
      %939 = vst [vmem:[%s240 + $0x20] sm:$0xf] %v907
      %940 = vst [vmem:[%s240 + $0x24] sm:$0xf] %v908
      %941 = vst [vmem:[%s240 + $0x28] sm:$0xf] %v909
      %942 = vst [vmem:[%s240 + $0x2c] sm:$0xf] %v910
      %943 = vst [vmem:[%s240 + $0x30] sm:$0xf] %v911
      %944 = vst [vmem:[%s240 + $0x34] sm:$0xf] %v912
      %945 = vst [vmem:[%s240 + $0x38] sm:$0xf] %v913
      %946 = vst [vmem:[%s240 + $0x3c] sm:$0xf] %v914
      %v947 = vadd.f32 %v851, %v852
      %v948 = vadd.f32 %v947, %v853
      %v949 = vadd.f32 %v948, %v854
      %v950 = vadd.f32 %v949, %v855
      %v951 = vadd.f32 %v950, %v856
      %v952 = vadd.f32 %v951, %v857
      %v953 = vadd.f32 %v952, %v858
      %v954 = vadd.f32 %v953, %v859
      %v955 = vadd.f32 %v954, %v860
      %v956 = vadd.f32 %v955, %v861
      %v957 = vadd.f32 %v956, %v862
      %v958 = vadd.f32 %v957, %v863
      %v959 = vadd.f32 %v958, %v864
      %v960 = vadd.f32 %v959, %v865
      %v961 = vadd.f32 %v960, %v866
      %v962 = vrot.slane %v961, 4
      %v963 = vadd.f32 %v961, %v962
      %v964 = vrot.slane %v963, 2
      %v965 = vadd.f32 %v963, %v964
      %v966 = vrot.slane %v965, 1
      %v967 = vadd.f32 %v965, %v966
      %968 = vst [vmem:[%s248] sm:$0x1] %v967
      %v969 = vmul.f32 %v851, %v851
      %v970 = vmul.f32 %v852, %v852
      %v971 = vmul.f32 %v853, %v853
      %v972 = vmul.f32 %v854, %v854
      %v973 = vmul.f32 %v855, %v855
      %v974 = vmul.f32 %v856, %v856
      %v975 = vmul.f32 %v857, %v857
      %v976 = vmul.f32 %v858, %v858
      %v977 = vmul.f32 %v859, %v859
      %v978 = vmul.f32 %v860, %v860
      %v979 = vmul.f32 %v861, %v861
      %v980 = vmul.f32 %v862, %v862
      %v981 = vmul.f32 %v863, %v863
      %v982 = vmul.f32 %v864, %v864
      %v983 = vmul.f32 %v865, %v865
      %v984 = vmul.f32 %v866, %v866
      %v985 = vadd.f32 %v969, %v970
      %v986 = vadd.f32 %v985, %v971
      %v987 = vadd.f32 %v986, %v972
      %v988 = vadd.f32 %v987, %v973
      %v989 = vadd.f32 %v988, %v974
      %v990 = vadd.f32 %v989, %v975
      %v991 = vadd.f32 %v990, %v976
      %v992 = vadd.f32 %v991, %v977
      %v993 = vadd.f32 %v992, %v978
      %v994 = vadd.f32 %v993, %v979
      %v995 = vadd.f32 %v994, %v980
      %v996 = vadd.f32 %v995, %v981
      %v997 = vadd.f32 %v996, %v982
      %v998 = vadd.f32 %v997, %v983
      %v999 = vadd.f32 %v998, %v984
      %v1000 = vrot.slane %v999, 4
      %v1001 = vadd.f32 %v999, %v1000
      %v1002 = vrot.slane %v1001, 2
      %v1003 = vadd.f32 %v1001, %v1002
      %v1004 = vrot.slane %v1003, 1
      %v1005 = vadd.f32 %v1003, %v1004
      %1006 = vst [vmem:[%s255] sm:$0x1] %v1005
      %s1007 = smul.u32 %s20, 2
      %s1008 = sadd.s32 %s1007, %s21
      %s1009 = smul.u32 16, %s1008
      %p1010 = scmp.lt.s32.totalorder %s1009, 63
      %s1011 = scalar_select %p1010, %s1009, 63
      %s1012 = smul.addr %s1011, 4
      %s1013 = scalar_lea.vmem %s2, %s1012
      %s1014 = smul.u32 %s20, 2
      %s1015 = sadd.s32 %s1014, %s21
      %p1016 = scmp.lt.s32.totalorder %s1015, 3
      %s1017 = scalar_select %p1016, %s1015, 3
      %s1018 = scalar_lea.vmem %s3, %s1017
      %s1019 = smul.u32 %s20, 2
      %s1020 = sadd.s32 %s1019, %s21
      %p1021 = scmp.lt.s32.totalorder %s1020, 3
      %s1022 = scalar_select %p1021, %s1020, 3
      %s1023 = scalar_lea.vmem %s4, %s1022
      // Predicated region
      $region29: #{complex_conv_block.2} parent=27 // pred_check
        %p1024 = pneg %p97
      $region30: #{complex_conv_block.2} parent=27 // pred_check_branch
        %1026 = sbr.rel (%p1024) target = $region32
      $region31: #{complex_conv_block.2} parent=27 // pred_region
        %s1027 = smul.u32 %s20, 2
        %s1028 = sadd.s32 %s1027, %s21
        %s1029 = smul.u32 16, %s1028
      $region32: #{complex_conv_block.2} parent=27 // pred_fallthru
        _
      // Predicated region
      $region33: #{complex_conv_block.2} parent=27 // pred_check
        %p1030 = pneg %p127
      $region34: #{complex_conv_block.2} parent=27 // pred_check_branch
        %1032 = sbr.rel (%p1030) target = $region36
      $region35: #{complex_conv_block.2} parent=27 // pred_region
        %s1033 = smul.u32 %s20, 2
        %s1034 = sadd.s32 %s1033, %s21
      $region36: #{complex_conv_block.2} parent=27 // pred_fallthru
        _
      // Predicated region
      $region37: #{complex_conv_block.2} parent=27 // pred_check
        %p1035 = pneg %p157
      $region38: #{complex_conv_block.2} parent=27 // pred_check_branch
        %1037 = sbr.rel (%p1035) target = $region40
      $region39: #{complex_conv_block.2} parent=27 // pred_region
        %s1038 = smul.u32 %s20, 2
        %s1039 = sadd.s32 %s1038, %s21
      $region40: #{complex_conv_block.2} parent=27 // pred_fallthru
        _
    $region28: #{complex_conv_block.2} parent=5 // pred_fallthru
      _
    %p1040 = scmp.le.s32.totalorder 2, %s11
    // Predicated region
    $region41: #{complex_conv_block.2} parent=5 // pred_check
      %p1041 = pneg %p1040
    $region42: #{complex_conv_block.2} parent=5 // pred_check_branch
      %1043 = sbr.rel (%p1041) target = $region44
    $region43: #{complex_conv_block.2} parent=5 // pred_region
      %s1044 = ssub.s32 %s11, 2
      // Predicated region
      $region45: #{complex_conv_block.2} parent=43 // pred_check
        %p1045 = pneg %p103
      $region46: #{complex_conv_block.2} parent=43 // pred_check_branch
        %1047 = sbr.rel (%p1045) target = $region48
      $region47: #{complex_conv_block.2} parent=43 // pred_region
        %s1048 = smul.u32 %s22, 2
        %s1049 = sadd.s32 %s1048, %s23
        %s1050 = smul.u32 16, %s1049
        %p1051 = scmp.lt.s32.totalorder %s1050, 63
        %s1052 = scalar_select %p1051, %s1050, 63
        %s1053 = smul.addr %s1052, 4
        %s1054 = scalar_lea.vmem %s2, %s1053
      $region48: #{complex_conv_block.2} parent=43 // pred_fallthru
        _
      // Predicated region
      $region49: #{complex_conv_block.2} parent=43 // pred_check
        %p1055 = pneg %p133
      $region50: #{complex_conv_block.2} parent=43 // pred_check_branch
        %1057 = sbr.rel (%p1055) target = $region52
      $region51: #{complex_conv_block.2} parent=43 // pred_region
        %s1058 = smul.u32 %s22, 2
        %s1059 = sadd.s32 %s1058, %s23
        %p1060 = scmp.lt.s32.totalorder %s1059, 3
        %s1061 = scalar_select %p1060, %s1059, 3
        %s1062 = scalar_lea.vmem %s3, %s1061
      $region52: #{complex_conv_block.2} parent=43 // pred_fallthru
        _
      // Predicated region
      $region53: #{complex_conv_block.2} parent=43 // pred_check
        %p1063 = pneg %p163
      $region54: #{complex_conv_block.2} parent=43 // pred_check_branch
        %1065 = sbr.rel (%p1063) target = $region56
      $region55: #{complex_conv_block.2} parent=43 // pred_region
        %s1066 = smul.u32 %s22, 2
        %s1067 = sadd.s32 %s1066, %s23
        %p1068 = scmp.lt.s32.totalorder %s1067, 3
        %s1069 = scalar_select %p1068, %s1067, 3
        %s1070 = scalar_lea.vmem %s4, %s1069
      $region56: #{complex_conv_block.2} parent=43 // pred_fallthru
        _
    $region44: #{complex_conv_block.2} parent=5 // pred_fallthru
      _
  $region6: #{complex_conv_block.2} parent=0 // loop_footer
    %s15 = sadd.s32 1, %s11
  $region7: #{complex_conv_block.2} parent=0 // loop_footer_branch
    %10 = sbr.rel target = $region3
  $region8: #{complex_conv_block.2} parent=0 // loop_exit
    _

</llo_original>
